<compile_context>
chip_gen: v7x
topology: tpu7x:2x2x1
jax: 0.10.0
libtpu: 0.0.40
codegen_flags: <defaults>
</compile_context>

<pallas_src>
import functools

import jax
import jax.numpy as jnp
from jax.experimental import pallas as pl
from jax.experimental.pallas import tpu as pltpu


def _round_up(x, m):
    return (x + m - 1) // m * m


def _num_tensorcores():
    """2 row-tiles on dual-TensorCore chips (v7x / megacore), 1 on v5e/v6e."""
    try:
        kind = jax.devices()[0].device_kind.lower()
    except Exception:
        return 1
    return 2 if any(t in kind for t in ("v7", "7x", "v4", "v5p")) else 1


# ---------------------------------------------------------------------------
# Fused Pallas kernel: full VAE forward for one row-tile
# ---------------------------------------------------------------------------

def _vae_fused_kernel(x_ref, eps_ref, *rest, n_enc, n_dec, seg_lat, b_off):
    # rest layout: enc_w[0..n_enc-1], merged_mu_ls_w, dec_w[0..n_dec-1], packed_bias, out_slab
    enc_w = rest[:n_enc]
    muls_w = rest[n_enc]
    dec_w = rest[n_enc + 1: n_enc + 1 + n_dec]
    b_ref = rest[n_enc + 1 + n_dec]
    out_ref = rest[n_enc + 2 + n_dec]

    def bias(k, n):
        off = b_off[k]                       # static, 128-lane aligned offset
        return b_ref[:, off:off + n]         # (1, n) -> broadcasts over rows

    # encoder stack: h = tanh(h @ W + b)
    bi = 0
    h = x_ref[...]
    for w in enc_w:
        n = w.shape[1]
        h = jnp.tanh(jnp.dot(h, w[...], preferred_element_type=jnp.float32) + bias(bi, n))
        bi += 1

    # merged, lane-padded mu / log_sigma projection (shared LHS -> one MXU pass).
    # lanes [0:seg_lat) = mu, lanes [seg_lat:2*seg_lat) = log_sigma; slices are tile-aligned.
    mls = jnp.dot(h, muls_w[...], preferred_element_type=jnp.float32) + bias(bi, 2 * seg_lat)
    bi += 1
    mu = mls[:, :seg_lat]
    log_sigma = mls[:, seg_lat:]

    # reparameterization fused in the epilogue (exp on the EUP slot)
    sigma = jnp.exp(log_sigma)
    z = mu + sigma * eps_ref[...]            # eps lane-padded with zeros -> pad lanes of z = 0

    # decoder stack: tanh after every layer except the last
    # (first decoder weight is row-padded latent->seg_lat, last is col-padded D0->seg_rec)
    d = z
    for li, w in enumerate(dec_w):
        n = w.shape[1]
        d = jnp.dot(d, w[...], preferred_element_type=jnp.float32) + bias(bi, n)
        bi += 1
        if li != n_dec - 1:
            d = jnp.tanh(d)

    # single lane-dense output slab: mu | sigma | z | recon, one unmasked store
    out_ref[...] = jnp.concatenate([mu, sigma, z, d], axis=1)


# ---------------------------------------------------------------------------
# Wrapper: one pallas_call for the whole forward
# ---------------------------------------------------------------------------

def vae_forward_fused(params, h_state, eps):
    M, D0 = h_state.shape
    enc = params["encoder"]            # list of (w (in,out), b (out,))
    dec = list(params["decoder"])
    w_mu, b_mu = params["enc_mu"]
    w_ls, b_ls = params["enc_log_sigma"]
    latent = w_mu.shape[1]
    hid_last = w_mu.shape[0]
    n_enc, n_dec = len(enc), len(dec)

    SEG = _round_up(latent, 128)       # lane segment width for mu / sigma / z
    SEG_R = _round_up(D0, 128)         # lane segment width for the reconstruction
    W_SLAB = 3 * SEG + SEG_R

    # merged + lane-padded mu / log_sigma projection: (hid_last, 2*SEG)
    muls_w = jnp.zeros((hid_last, 2 * SEG), jnp.float32)
    muls_w = muls_w.at[:, :latent].set(w_mu).at[:, SEG:SEG + latent].set(w_ls)
    muls_b = jnp.zeros((2 * SEG,), jnp.float32)
    muls_b = muls_b.at[:latent].set(b_mu).at[SEG:SEG + latent].set(b_ls)

    # decoder weights: zero-pad first layer's input dim (latent -> SEG) and last layer's
    # output dim (D0 -> SEG_R) so decoder in/out stay lane-aligned (math unchanged).
    dec_w = [w for (w, _) in dec]
    dec_b = [b for (_, b) in dec]
    w0 = dec_w[0]
    dec_w[0] = jnp.zeros((SEG, w0.shape[1]), jnp.float32).at[:latent, :].set(w0)
    wl = dec_w[-1]
    dec_w[-1] = jnp.zeros((wl.shape[0], SEG_R), jnp.float32).at[:, :D0].set(wl)
    dec_b[-1] = jnp.zeros((SEG_R,), jnp.float32).at[:D0].set(dec_b[-1])

    weights = [w for (w, _) in enc] + [muls_w] + dec_w
    biases = [b for (_, b) in enc] + [muls_b] + dec_b

    # pack all biases into one lane-aligned VMEM buffer (one DMA instead of one per layer)
    slot = _round_up(max(int(b.shape[0]) for b in biases), 128)
    b_off = tuple(i * slot for i in range(len(biases)))
    packed = jnp.zeros((1, slot * len(biases)), jnp.float32)
    for i, b in enumerate(biases):
        packed = packed.at[0, b_off[i]:b_off[i] + b.shape[0]].set(b)

    # lane-pad eps to SEG so per-tile loads are unmasked
    eps_p = jnp.zeros((M, SEG), jnp.float32).at[:, :latent].set(eps)

    # grid: one row tile per TensorCore (1 step on v5e/v6e, 2 parallel tiles on v7x),
    # capped so tiles stay small even for very large M; rows zero-padded to fit.
    MAX_TILE_M = 512
    n_tiles = max(_num_tensorcores(), pl.cdiv(M, MAX_TILE_M))
    m_pad = _round_up(M, 8 * n_tiles)
    tile_m = m_pad // n_tiles
    x_in = h_state
    if m_pad != M:
        x_in = jnp.zeros((m_pad, D0), jnp.float32).at[:M].set(h_state)
        eps_p = jnp.zeros((m_pad, SEG), jnp.float32).at[:M].set(eps_p)

    in_specs = [
        pl.BlockSpec((tile_m, D0), lambda i: (i, 0)),        # h_state row tile
        pl.BlockSpec((tile_m, SEG), lambda i: (i, 0)),       # eps row tile (lane padded)
    ]
    # weights/biases: constant block index -> fetched once, resident across the grid
    # TODO(synk): could mark these pipeline_mode=pl.Buffered(1) to skip the second pipeline
    #             buffer; negligible at this size, left default for portability.
    in_specs += [pl.BlockSpec(w.shape, lambda i: (0, 0)) for w in weights]
    in_specs += [pl.BlockSpec(packed.shape, lambda i: (0, 0))]

    out_shape = jax.ShapeDtypeStruct((m_pad, W_SLAB), jnp.float32)
    out_spec = pl.BlockSpec((tile_m, W_SLAB), lambda i: (i, 0))

    kernel = functools.partial(
        _vae_fused_kernel, n_enc=n_enc, n_dec=n_dec, seg_lat=SEG, b_off=b_off)

    slab = pl.pallas_call(
        kernel,
        out_shape=out_shape,
        grid=(n_tiles,),
        in_specs=in_specs,
        out_specs=out_spec,
        compiler_params=pltpu.CompilerParams(
            dimension_semantics=("parallel",)),   # row tiles split across TCs on v7x
    )(x_in, eps_p, *weights, packed)

    mu = slab[:M, 0:latent]
    sigma = slab[:M, SEG:SEG + latent]
    z = slab[:M, 2 * SEG:2 * SEG + latent]
    recon = slab[:M, 3 * SEG:3 * SEG + D0]
    return mu, sigma, z, recon


# ---------------------------------------------------------------------------
# Pure-JAX reference (mirrors VAE.forward semantics)
# ---------------------------------------------------------------------------

def vae_forward_ref(params, h_state, eps):
    h = h_state
    for (w, b) in params["encoder"]:
        h = jnp.tanh(h @ w + b)
    mu = h @ params["enc_mu"][0] + params["enc_mu"][1]
    log_sigma = h @ params["enc_log_sigma"][0] + params["enc_log_sigma"][1]
    sigma = jnp.exp(log_sigma)
    z = mu + sigma * eps
    d = z
    n_dec = len(params["decoder"])
    for i, (w, b) in enumerate(params["decoder"]):
        d = d @ w + b
        if i != n_dec - 1:
            d = jnp.tanh(d)
    return mu, sigma, z, d


# ---------------------------------------------------------------------------
# Parameter construction (deterministic, mirrors VAE.__init__ shapes)
# ---------------------------------------------------------------------------

def _xavier_uniform(key, fan_in, fan_out):
    bound = jnp.sqrt(6.0 / (fan_in + fan_out))
    # stored as (in, out) == PyTorch weight (out, in) transposed (xavier bound is symmetric)
    return jax.random.uniform(key, (fan_in, fan_out), jnp.float32, -bound, bound)


def init_vae_params(key, struct):
    """struct: e.g. [in_dim, hidden, latent] (same convention as config.struct)."""
    params = {"encoder": [], "decoder": []}
    n_layers = len(struct) - 1

    # encoder stack: xavier_uniform weight, uniform[0,1) bias (matches init_model_weight)
    for i in range(n_layers):
        key, kw, kb = jax.random.split(key, 3)
        params["encoder"].append(
            (_xavier_uniform(kw, struct[i], struct[i + 1]),
             jax.random.uniform(kb, (struct[i + 1],), jnp.float32)))

    # enc_mu / enc_log_sigma: struct[-1] -> struct[-1]
    d = struct[-1]
    key, kw, kb = jax.random.split(key, 3)
    params["enc_mu"] = (_xavier_uniform(kw, d, d),
                        jax.random.uniform(kb, (d,), jnp.float32))
    key, kw, kb = jax.random.split(key, 3)
    params["enc_log_sigma"] = (_xavier_uniform(kw, d, d),
                               jax.random.uniform(kb, (d,), jnp.float32))

    # decoder stack: reversed struct
    struct_rev = list(reversed(struct))
    for i in range(n_layers):
        key, kw, kb = jax.random.split(key, 3)
        params["decoder"].append(
            (_xavier_uniform(kw, struct_rev[i], struct_rev[i + 1]),
             jax.random.uniform(kb, (struct_rev[i + 1],), jnp.float32)))

    return params


# ---------------------------------------------------------------------------
# Example run
# ---------------------------------------------------------------------------

if __name__ == "__main__":
    key = jax.random.PRNGKey(0)

    N = 256
    struct = [64, 32, 16]  # config.struct : input -> hidden -> latent

    k_params, k_input, k_eps = jax.random.split(key, 3)
    params = init_vae_params(k_params, struct)
    h_state = jax.random.normal(k_input, (N, struct[0]), jnp.float32)
    # torch draws np.random.normal at forward time; here a deterministic normal draw passed in
    # TODO(synk): could generate eps in-kernel with pltpu.prng_seed/stateful_normal, kept as an
    #             explicit input for deterministic comparison against the reference.
    eps = jax.random.normal(k_eps, (N, struct[-1]), jnp.float32)

    mu, sigma, z, recon = jax.block_until_ready(
        vae_forward_fused(params, h_state, eps))

    assert mu.shape == (N, struct[-1])
    assert sigma.shape == (N, struct[-1])
    assert z.shape == (N, struct[-1])
    assert recon.shape == (N, struct[0])

    # correctness vs pure-JAX reference
    rmu, rsigma, rz, rrecon = vae_forward_ref(params, h_state, eps)
    assert bool(jnp.allclose(mu, rmu, atol=1e-4, rtol=1e-4))
    assert bool(jnp.allclose(sigma, rsigma, atol=1e-4, rtol=1e-4))
    assert bool(jnp.allclose(z, rz, atol=1e-4, rtol=1e-4))
    assert bool(jnp.allclose(recon, rrecon, atol=1e-4, rtol=1e-4))
    assert bool(jnp.all(jnp.isfinite(recon)))

    print("KERNEL_OK")
</pallas_src>

<mosaic_0001>
module attributes {stable_mosaic.version = 11 : i64} {
  func.func @_vae_fused_kernel(%arg0: i32, %arg1: memref<256x64xf32, #tpu.memory_space<vmem>>, %arg2: memref<256x128xf32, #tpu.memory_space<vmem>>, %arg3: memref<64x32xf32, #tpu.memory_space<vmem>>, %arg4: memref<32x16xf32, #tpu.memory_space<vmem>>, %arg5: memref<16x256xf32, #tpu.memory_space<vmem>>, %arg6: memref<128x32xf32, #tpu.memory_space<vmem>>, %arg7: memref<32x128xf32, #tpu.memory_space<vmem>>, %arg8: memref<1x1280xf32, #tpu.memory_space<vmem>>, %arg9: memref<256x512xf32, #tpu.memory_space<vmem>>) attributes {dimension_semantics = [#tpu.dimension_semantics<parallel>], iteration_bounds = array<i64: 1>, scalar_prefetch = 0 : i64, scratch_operands = 0 : i64, tpu.core_type = #tpu.core_type<tc>, window_params = [{transform_indices = @transform_0, window_bounds = array<i64: 256, 64>}, {transform_indices = @transform_1, window_bounds = array<i64: 256, 128>}, {pipeline_mode = #tpu.pipeline_mode<synchronous>, transform_indices = @transform_2, window_bounds = array<i64: 64, 32>}, {pipeline_mode = #tpu.pipeline_mode<synchronous>, transform_indices = @transform_3, window_bounds = array<i64: 32, 16>}, {pipeline_mode = #tpu.pipeline_mode<synchronous>, transform_indices = @transform_4, window_bounds = array<i64: 16, 256>}, {pipeline_mode = #tpu.pipeline_mode<synchronous>, transform_indices = @transform_5, window_bounds = array<i64: 128, 32>}, {pipeline_mode = #tpu.pipeline_mode<synchronous>, transform_indices = @transform_6, window_bounds = array<i64: 32, 128>}, {pipeline_mode = #tpu.pipeline_mode<synchronous>, transform_indices = @transform_7, window_bounds = array<i64: 1, 1280>}, {transform_indices = @transform_8, window_bounds = array<i64: 256, 512>}]} {
    %c0 = arith.constant 0 : index
    %c0_0 = arith.constant 0 : index
    %0 = vector.load %arg1[%c0, %c0_0] : memref<256x64xf32, #tpu.memory_space<vmem>>, vector<256x64xf32>
    %c0_1 = arith.constant 0 : index
    %c0_2 = arith.constant 0 : index
    %1 = vector.load %arg3[%c0_1, %c0_2] : memref<64x32xf32, #tpu.memory_space<vmem>>, vector<64x32xf32>
    %cst = arith.constant dense<0.000000e+00> : vector<256x32xf32>
    %2 = tpu.matmul %0, %1, %cst {dimension_numbers = #tpu.dot_dimension_numbers<[1], [0], [0], [1], [0, 0, 1, 1], [], []>} : vector<256x64xf32>, vector<64x32xf32>, vector<256x32xf32> -> vector<256x32xf32>
    %c0_3 = arith.constant 0 : index
    %c0_4 = arith.constant 0 : index
    %3 = vector.load %arg8[%c0_3, %c0_4] : memref<1x1280xf32, #tpu.memory_space<vmem>>, vector<1x32xf32>
    %4 = vector.broadcast %3 : vector<1x32xf32> to vector<256x32xf32>
    %5 = arith.addf %2, %4 : vector<256x32xf32>
    %6 = math.tanh %5 : vector<256x32xf32>
    %c0_5 = arith.constant 0 : index
    %c0_6 = arith.constant 0 : index
    %7 = vector.load %arg4[%c0_5, %c0_6] : memref<32x16xf32, #tpu.memory_space<vmem>>, vector<32x16xf32>
    %cst_7 = arith.constant dense<0.000000e+00> : vector<256x16xf32>
    %8 = tpu.matmul %6, %7, %cst_7 {dimension_numbers = #tpu.dot_dimension_numbers<[1], [0], [0], [1], [0, 0, 1, 1], [], []>} : vector<256x32xf32>, vector<32x16xf32>, vector<256x16xf32> -> vector<256x16xf32>
    %c0_8 = arith.constant 0 : index
    %c256 = arith.constant 256 : index
    %9 = vector.load %arg8[%c0_8, %c256] : memref<1x1280xf32, #tpu.memory_space<vmem>>, vector<1x16xf32>
    %10 = vector.broadcast %9 : vector<1x16xf32> to vector<256x16xf32>
    %11 = arith.addf %8, %10 : vector<256x16xf32>
    %12 = math.tanh %11 : vector<256x16xf32>
    %c0_9 = arith.constant 0 : index
    %c0_10 = arith.constant 0 : index
    %13 = vector.load %arg5[%c0_9, %c0_10] : memref<16x256xf32, #tpu.memory_space<vmem>>, vector<16x256xf32>
    %cst_11 = arith.constant dense<0.000000e+00> : vector<256x256xf32>
    %14 = tpu.matmul %12, %13, %cst_11 {dimension_numbers = #tpu.dot_dimension_numbers<[1], [0], [0], [1], [0, 0, 1, 1], [], []>} : vector<256x16xf32>, vector<16x256xf32>, vector<256x256xf32> -> vector<256x256xf32>
    %c0_12 = arith.constant 0 : index
    %c512 = arith.constant 512 : index
    %15 = vector.load %arg8[%c0_12, %c512] : memref<1x1280xf32, #tpu.memory_space<vmem>>, vector<1x256xf32>
    %16 = vector.broadcast %15 : vector<1x256xf32> to vector<256x256xf32>
    %17 = arith.addf %14, %16 : vector<256x256xf32>
    %18 = vector.extract_strided_slice %17 {offsets = [0, 0], sizes = [256, 128], strides = [1, 1]} : vector<256x256xf32> to vector<256x128xf32>
    %19 = vector.extract_strided_slice %17 {offsets = [0, 128], sizes = [256, 128], strides = [1, 1]} : vector<256x256xf32> to vector<256x128xf32>
    %20 = math.exp %19 : vector<256x128xf32>
    %c0_13 = arith.constant 0 : index
    %c0_14 = arith.constant 0 : index
    %21 = vector.load %arg2[%c0_13, %c0_14] : memref<256x128xf32, #tpu.memory_space<vmem>>, vector<256x128xf32>
    %22 = arith.mulf %20, %21 : vector<256x128xf32>
    %23 = arith.addf %18, %22 : vector<256x128xf32>
    %c0_15 = arith.constant 0 : index
    %c0_16 = arith.constant 0 : index
    %24 = vector.load %arg6[%c0_15, %c0_16] : memref<128x32xf32, #tpu.memory_space<vmem>>, vector<128x32xf32>
    %cst_17 = arith.constant dense<0.000000e+00> : vector<256x32xf32>
    %25 = tpu.matmul %23, %24, %cst_17 {dimension_numbers = #tpu.dot_dimension_numbers<[1], [0], [0], [1], [0, 0, 1, 1], [], []>} : vector<256x128xf32>, vector<128x32xf32>, vector<256x32xf32> -> vector<256x32xf32>
    %c0_18 = arith.constant 0 : index
    %c768 = arith.constant 768 : index
    %26 = vector.load %arg8[%c0_18, %c768] : memref<1x1280xf32, #tpu.memory_space<vmem>>, vector<1x32xf32>
    %27 = vector.broadcast %26 : vector<1x32xf32> to vector<256x32xf32>
    %28 = arith.addf %25, %27 : vector<256x32xf32>
    %29 = math.tanh %28 : vector<256x32xf32>
    %c0_19 = arith.constant 0 : index
    %c0_20 = arith.constant 0 : index
    %30 = vector.load %arg7[%c0_19, %c0_20] : memref<32x128xf32, #tpu.memory_space<vmem>>, vector<32x128xf32>
    %cst_21 = arith.constant dense<0.000000e+00> : vector<256x128xf32>
    %31 = tpu.matmul %29, %30, %cst_21 {dimension_numbers = #tpu.dot_dimension_numbers<[1], [0], [0], [1], [0, 0, 1, 1], [], []>} : vector<256x32xf32>, vector<32x128xf32>, vector<256x128xf32> -> vector<256x128xf32>
    %c0_22 = arith.constant 0 : index
    %c1024 = arith.constant 1024 : index
    %32 = vector.load %arg8[%c0_22, %c1024] : memref<1x1280xf32, #tpu.memory_space<vmem>>, vector<1x128xf32>
    %33 = vector.broadcast %32 : vector<1x128xf32> to vector<256x128xf32>
    %34 = arith.addf %31, %33 : vector<256x128xf32>
    %35 = tpu.concatenate %18, %20, %23, %34 in 1 : vector<256x128xf32>, vector<256x128xf32>, vector<256x128xf32>, vector<256x128xf32> -> vector<256x512xf32>
    %c0_23 = arith.constant 0 : index
    %c0_24 = arith.constant 0 : index
    %36 = vector.load %arg9[%c0_23, %c0_24] : memref<256x512xf32, #tpu.memory_space<vmem>>, vector<256x512xf32>
    tpu.vector_store %arg9[%c0_23, %c0_24], %35 {strides = array<i32>} : memref<256x512xf32, #tpu.memory_space<vmem>>, vector<256x512xf32>,
    return
  }
  func.func @transform_0(%arg0: i32) -> (i32, i32) {
    %c0_i32 = arith.constant 0 : i32
    %c0_i32_0 = arith.constant 0 : i32
    return %arg0, %c0_i32 : i32, i32
  }
  func.func @transform_1(%arg0: i32) -> (i32, i32) {
    %c0_i32 = arith.constant 0 : i32
    %c0_i32_0 = arith.constant 0 : i32
    return %arg0, %c0_i32 : i32, i32
  }
  func.func @transform_2(%arg0: i32) -> (i32, i32) {
    %c0_i32 = arith.constant 0 : i32
    %c0_i32_0 = arith.constant 0 : i32
    %c0_i32_1 = arith.constant 0 : i32
    return %c0_i32, %c0_i32_0 : i32, i32
  }
  func.func @transform_3(%arg0: i32) -> (i32, i32) {
    %c0_i32 = arith.constant 0 : i32
    %c0_i32_0 = arith.constant 0 : i32
    %c0_i32_1 = arith.constant 0 : i32
    return %c0_i32, %c0_i32_0 : i32, i32
  }
  func.func @transform_4(%arg0: i32) -> (i32, i32) {
    %c0_i32 = arith.constant 0 : i32
    %c0_i32_0 = arith.constant 0 : i32
    %c0_i32_1 = arith.constant 0 : i32
    return %c0_i32, %c0_i32_0 : i32, i32
  }
  func.func @transform_5(%arg0: i32) -> (i32, i32) {
    %c0_i32 = arith.constant 0 : i32
    %c0_i32_0 = arith.constant 0 : i32
    %c0_i32_1 = arith.constant 0 : i32
    return %c0_i32, %c0_i32_0 : i32, i32
  }
  func.func @transform_6(%arg0: i32) -> (i32, i32) {
    %c0_i32 = arith.constant 0 : i32
    %c0_i32_0 = arith.constant 0 : i32
    %c0_i32_1 = arith.constant 0 : i32
    return %c0_i32, %c0_i32_0 : i32, i32
  }
  func.func @transform_7(%arg0: i32) -> (i32, i32) {
    %c0_i32 = arith.constant 0 : i32
    %c0_i32_0 = arith.constant 0 : i32
    %c0_i32_1 = arith.constant 0 : i32
    return %c0_i32, %c0_i32_0 : i32, i32
  }
  func.func @transform_8(%arg0: i32) -> (i32, i32) {
    %c0_i32 = arith.constant 0 : i32
    %c0_i32_0 = arith.constant 0 : i32
    return %arg0, %c0_i32 : i32, i32
  }
}

</mosaic_0001>

<llo_original>
// kernel: tpu_custom_call.1
$region0: #{tpu_custom_call.1}
  #allocation0 [shape = 'u32[]', space=smem, size = 0x4, offset = 0x4, fixed_abs, tag = 'smem constant byte address 0x4 - core index']
  #allocation1 [shape = 'u32[144,128]{1,0:T(1,128)}', space=vmem, size = 0x12000, scoped, tag = 'internal scratch']
  %s0 = inlined_call_operand.vmem [shape: f32[256,64], index: 0, kind: input, shape index: {}]
  %s1 = inlined_call_operand.vmem [shape: f32[256,128], index: 1, kind: input, shape index: {}]
  %s2 = inlined_call_operand.vmem [shape: f32[64,32], index: 2, kind: input, shape index: {}]
  %s3 = inlined_call_operand.vmem [shape: f32[32,16], index: 3, kind: input, shape index: {}]
  %s4 = inlined_call_operand.vmem [shape: f32[16,256], index: 4, kind: input, shape index: {}]
  %s5 = inlined_call_operand.vmem [shape: f32[128,32], index: 5, kind: input, shape index: {}]
  %s6 = inlined_call_operand.vmem [shape: f32[32,128], index: 6, kind: input, shape index: {}]
  %s7 = inlined_call_operand.vmem [shape: f32[1,1280], index: 7, kind: input, shape index: {}]
  %s8 = inlined_call_operand.hbm [shape: f32[256,512], index: 8, kind: output, shape index: {}]
  %s9 = sld [smem:[#allocation0]]
  $region42: #{tpu_custom_call.1} parent=0
    _
  %s11 = ssub.s32 1, %s9
  %s12 = scalar_select 0, %s11, %s9
  $region1: #{tpu_custom_call.1} parent=0
    #allocation2 [shape = 'u8[524288]{0}', space=vmem, size = 0x80000, scoped, tag = 'output window, operand 0, single buffered']
    #allocation3 [shape = 's32[1]{0}', space=sflag, size = 0x4, scoped, tag = 'scoped memory for tpu_custom_call.1']
    %13 = vsyncpa [#allocation3], 0
    // Predicated region
    $region2: #{tpu_custom_call.1} parent=1 // pred_check
      _
    $region3: #{tpu_custom_call.1} parent=1 // pred_check_branch
      %15 = sbr.rel (0) target = $region5
    $region4: #{tpu_custom_call.1} parent=1 // pred_region
      _
    $region5: #{tpu_custom_call.1} parent=1 // pred_fallthru
      _
    // Predicated region
    $region6: #{tpu_custom_call.1} parent=1 // pred_check
      _
    $region7: #{tpu_custom_call.1} parent=1 // pred_check_branch
      %17 = sbr.rel (0) target = $region9
    $region8: #{tpu_custom_call.1} parent=1 // pred_region
      _
    $region9: #{tpu_custom_call.1} parent=1 // pred_fallthru
      _
    // Predicated region
    $region10: #{tpu_custom_call.1} parent=1 // pred_check
      _
    $region11: #{tpu_custom_call.1} parent=1 // pred_check_branch
      %19 = sbr.rel (0) target = $region13
    $region12: #{tpu_custom_call.1} parent=1 // pred_region
      _
    $region13: #{tpu_custom_call.1} parent=1 // pred_fallthru
      _
    // Predicated region
    $region14: #{tpu_custom_call.1} parent=1 // pred_check
      _
    $region15: #{tpu_custom_call.1} parent=1 // pred_check_branch
      %21 = sbr.rel (0) target = $region17
    $region16: #{tpu_custom_call.1} parent=1 // pred_region
      _
    $region17: #{tpu_custom_call.1} parent=1 // pred_fallthru
      _
    // Predicated region
    $region18: #{tpu_custom_call.1} parent=1 // pred_check
      _
    $region19: #{tpu_custom_call.1} parent=1 // pred_check_branch
      %23 = sbr.rel (0) target = $region21
    $region20: #{tpu_custom_call.1} parent=1 // pred_region
      _
    $region21: #{tpu_custom_call.1} parent=1 // pred_fallthru
      _
    // Predicated region
    $region22: #{tpu_custom_call.1} parent=1 // pred_check
      _
    $region23: #{tpu_custom_call.1} parent=1 // pred_check_branch
      %25 = sbr.rel (0) target = $region25
    $region24: #{tpu_custom_call.1} parent=1 // pred_region
      _
    $region25: #{tpu_custom_call.1} parent=1 // pred_fallthru
      _
    // Predicated region
    $region26: #{tpu_custom_call.1} parent=1 // pred_check
      _
    $region27: #{tpu_custom_call.1} parent=1 // pred_check_branch
      %27 = sbr.rel (0) target = $region29
    $region28: #{tpu_custom_call.1} parent=1 // pred_region
      _
    $region29: #{tpu_custom_call.1} parent=1 // pred_fallthru
      _
    // Predicated region
    $region30: #{tpu_custom_call.1} parent=1 // pred_check
      _
    $region31: #{tpu_custom_call.1} parent=1 // pred_check_branch
      %29 = sbr.rel (0) target = $region33
    $region32: #{tpu_custom_call.1} parent=1 // pred_region
      _
    $region33: #{tpu_custom_call.1} parent=1 // pred_fallthru
      _
    %v30 = vld [vmem:[%s0] sm:$0xff]
    %v31 = vld [vmem:[%s0 + $0x8] sm:$0xff]
    %v32 = vld [vmem:[%s0 + $0x10] sm:$0xff]
    %v33 = vld [vmem:[%s0 + $0x18] sm:$0xff]
    %v34 = vld [vmem:[%s0 + $0x20] sm:$0xff]
    %v35 = vld [vmem:[%s0 + $0x28] sm:$0xff]
    %v36 = vld [vmem:[%s0 + $0x30] sm:$0xff]
    %v37 = vld [vmem:[%s0 + $0x38] sm:$0xff]
    %v38 = vld [vmem:[%s0 + $0x40] sm:$0xff]
    %v39 = vld [vmem:[%s0 + $0x48] sm:$0xff]
    %v40 = vld [vmem:[%s0 + $0x50] sm:$0xff]
    %v41 = vld [vmem:[%s0 + $0x58] sm:$0xff]
    %v42 = vld [vmem:[%s0 + $0x60] sm:$0xff]
    %v43 = vld [vmem:[%s0 + $0x68] sm:$0xff]
    %v44 = vld [vmem:[%s0 + $0x70] sm:$0xff]
    %v45 = vld [vmem:[%s0 + $0x78] sm:$0xff]
    %v46 = vld [vmem:[%s0 + $0x80] sm:$0xff]
    %v47 = vld [vmem:[%s0 + $0x88] sm:$0xff]
    %v48 = vld [vmem:[%s0 + $0x90] sm:$0xff]
    %v49 = vld [vmem:[%s0 + $0x98] sm:$0xff]
    %v50 = vld [vmem:[%s0 + $0xa0] sm:$0xff]
    %v51 = vld [vmem:[%s0 + $0xa8] sm:$0xff]
    %v52 = vld [vmem:[%s0 + $0xb0] sm:$0xff]
    %v53 = vld [vmem:[%s0 + $0xb8] sm:$0xff]
    %v54 = vld [vmem:[%s0 + $0xc0] sm:$0xff]
    %v55 = vld [vmem:[%s0 + $0xc8] sm:$0xff]
    %v56 = vld [vmem:[%s0 + $0xd0] sm:$0xff]
    %v57 = vld [vmem:[%s0 + $0xd8] sm:$0xff]
    %v58 = vld [vmem:[%s0 + $0xe0] sm:$0xff]
    %v59 = vld [vmem:[%s0 + $0xe8] sm:$0xff]
    %v60 = vld [vmem:[%s0 + $0xf0] sm:$0xff]
    %v61 = vld [vmem:[%s0 + $0xf8] sm:$0xff]
    %v62 = vld [vmem:[%s2] sm:$0xff]
    %v63 = vld [vmem:[%s2 + $0x8] sm:$0xff]
    %v64 = vld [vmem:[%s2 + $0x10] sm:$0xff]
    %v65 = vld [vmem:[%s2 + $0x18] sm:$0xff]
    %v66 = vld [vmem:[%s2 + $0x20] sm:$0xff]
    %v67 = vld [vmem:[%s2 + $0x28] sm:$0xff]
    %v68 = vld [vmem:[%s2 + $0x30] sm:$0xff]
    %v69 = vld [vmem:[%s2 + $0x38] sm:$0xff]
    %v70 = vld [vmem:[%s7] sm:$0x1]
    %v72 = vlaneseq
    %v73 = vshrl.u32 %v72, 7
    %v74 = vsub.s32 0, %v73
    %v75 = vrot.slane %v70, %v74
    %vm77 = vcmask 523264
    %v79 = vsel %vm77, %v30, 0
    %v82 = vsel %vm77, %v31, 0
    %v85 = vsel %vm77, %v32, 0
    %v88 = vsel %vm77, %v33, 0
    %v91 = vsel %vm77, %v34, 0
    %v94 = vsel %vm77, %v35, 0
    %v97 = vsel %vm77, %v36, 0
    %v100 = vsel %vm77, %v37, 0
    %v103 = vsel %vm77, %v38, 0
    %v106 = vsel %vm77, %v39, 0
    %v109 = vsel %vm77, %v40, 0
    %v112 = vsel %vm77, %v41, 0
    %v115 = vsel %vm77, %v42, 0
    %v118 = vsel %vm77, %v43, 0
    %v121 = vsel %vm77, %v44, 0
    %v124 = vsel %vm77, %v45, 0
    %v127 = vsel %vm77, %v46, 0
    %v130 = vsel %vm77, %v47, 0
    %v133 = vsel %vm77, %v48, 0
    %v136 = vsel %vm77, %v49, 0
    %v139 = vsel %vm77, %v50, 0
    %v142 = vsel %vm77, %v51, 0
    %v145 = vsel %vm77, %v52, 0
    %v148 = vsel %vm77, %v53, 0
    %v151 = vsel %vm77, %v54, 0
    %v154 = vsel %vm77, %v55, 0
    %v157 = vsel %vm77, %v56, 0
    %v160 = vsel %vm77, %v57, 0
    %v163 = vsel %vm77, %v58, 0
    %v166 = vsel %vm77, %v59, 0
    %v169 = vsel %vm77, %v60, 0
    %v172 = vsel %vm77, %v61, 0
    %174 = vmatprep.subr.mxu0 0.0
    %175 = vmatpush1.msra.mxu0 %v62
    %176 = vmatprep.subr.mxu0 0.0
    %177 = vmatpush1.msra.mxu0 %v63
    %178 = vmatprep.subr.mxu0 0.0
    %179 = vmatpush1.msra.mxu0 %v64
    %180 = vmatprep.subr.mxu0 0.0
    %181 = vmatpush1.msra.mxu0 %v65
    %182 = vmatprep.subr.mxu0 0.0
    %183 = vmatpush1.msra.mxu0 %v66
    %184 = vmatprep.subr.mxu0 0.0
    %185 = vmatpush1.msra.mxu0 %v67
    %186 = vmatprep.subr.mxu0 0.0
    %187 = vmatpush1.msra.mxu0 %v68
    %188 = vmatprep.subr.mxu0 0.0
    %189 = vmatpush1.msra.mxu0 %v69
    %190 = vmatprep.subr.mxu0 0.0
    %191 = vmatpush1.msra.mxu0 0.0
    %192 = vmatprep.subr.mxu0 0.0
    %193 = vmatpush1.msra.mxu0 0.0
    %194 = vmatprep.subr.mxu0 0.0
    %195 = vmatpush1.msra.mxu0 0.0
    %196 = vmatprep.subr.mxu0 0.0
    %197 = vmatpush1.msra.mxu0 0.0
    %198 = vmatprep.subr.mxu0 0.0
    %199 = vmatpush1.msra.mxu0 0.0
    %200 = vmatprep.subr.mxu0 0.0
    %201 = vmatpush1.msra.mxu0 0.0
    %202 = vmatprep.subr.mxu0 0.0
    %203 = vmatpush1.msra.mxu0 0.0
    %204 = vmatprep.subr.mxu0 0.0
    %205 = vmatpush1.msra.mxu0 0.0
    %206 = vmatprep.subr.mxu0 0.0
    %207 = vmatpush1.msra.mxu0 0.0
    %208 = vmatprep.subr.mxu0 0.0
    %209 = vmatpush1.msra.mxu0 0.0
    %210 = vmatprep.subr.mxu0 0.0
    %211 = vmatpush1.msra.mxu0 0.0
    %212 = vmatprep.subr.mxu0 0.0
    %213 = vmatpush1.msra.mxu0 0.0
    %214 = vmatprep.subr.mxu0 0.0
    %215 = vmatpush1.msra.mxu0 0.0
    %216 = vmatprep.subr.mxu0 0.0
    %217 = vmatpush1.msra.mxu0 0.0
    %218 = vmatprep.subr.mxu0 0.0
    %219 = vmatpush1.msra.mxu0 0.0
    %220 = vmatprep.subr.mxu0 0.0
    %221 = vmatpush1.msra.mxu0 0.0
    %222 = vmatprep.subr.mxu0 0.0
    %223 = vmatpush1.msra.mxu0 0.0
    %224 = vmatprep.subr.mxu0 0.0
    %225 = vmatpush1.msra.mxu0 0.0
    %226 = vmatprep.subr.mxu0 0.0
    %227 = vmatpush1.msra.mxu0 0.0
    %228 = vmatprep.subr.mxu0 0.0
    %229 = vmatpush1.msra.mxu0 0.0
    %230 = vmatprep.subr.mxu0 0.0
    %231 = vmatpush1.msra.mxu0 0.0
    %232 = vmatprep.subr.mxu0 0.0
    %233 = vmatpush1.msra.mxu0 0.0
    %234 = vmatprep.subr.mxu0 0.0
    %235 = vmatpush1.msra.mxu0 0.0
    %236 = vmatprep.subr.mxu0 0.0
    %237 = vmatpush1.msra.mxu0 0.0
    %238 = vmatprep.mubr.f32.mxu0 0.0
    %239 = vmatmul.mubr.f32.gmra.mrb[0].mxu0 %v79
    %v240 = vpop.f32.mrb[0].mxu0
    %v241 = vadd.f32 %v75, %v240
    %v242 = vpop.f32.mrb[0].mxu0
    %243 = vmatprep.mubr.f32.mxu0 0.0
    %244 = vmatmul.mubr.f32.gmra.mrb[0].mxu0 %v82
    %v245 = vpop.f32.mrb[0].mxu0
    %v246 = vadd.f32 %v75, %v245
    %v247 = vpop.f32.mrb[0].mxu0
    %248 = vmatprep.mubr.f32.mxu0 0.0
    %249 = vmatmul.mubr.f32.gmra.mrb[0].mxu0 %v85
    %v250 = vpop.f32.mrb[0].mxu0
    %v251 = vadd.f32 %v75, %v250
    %v252 = vpop.f32.mrb[0].mxu0
    %253 = vmatprep.mubr.f32.mxu0 0.0
    %254 = vmatmul.mubr.f32.gmra.mrb[0].mxu0 %v88
    %v255 = vpop.f32.mrb[0].mxu0
    %v256 = vadd.f32 %v75, %v255
    %v257 = vpop.f32.mrb[0].mxu0
    %258 = vmatprep.mubr.f32.mxu0 0.0
    %259 = vmatmul.mubr.f32.gmra.mrb[0].mxu0 %v91
    %v260 = vpop.f32.mrb[0].mxu0
    %v261 = vadd.f32 %v75, %v260
    %v262 = vpop.f32.mrb[0].mxu0
    %263 = vmatprep.mubr.f32.mxu0 0.0
    %264 = vmatmul.mubr.f32.gmra.mrb[0].mxu0 %v94
    %v265 = vpop.f32.mrb[0].mxu0
    %v266 = vadd.f32 %v75, %v265
    %v267 = vpop.f32.mrb[0].mxu0
    %268 = vmatprep.mubr.f32.mxu0 0.0
    %269 = vmatmul.mubr.f32.gmra.mrb[0].mxu0 %v97
    %v270 = vpop.f32.mrb[0].mxu0
    %v271 = vadd.f32 %v75, %v270
    %v272 = vpop.f32.mrb[0].mxu0
    %273 = vmatprep.mubr.f32.mxu0 0.0
    %274 = vmatmul.mubr.f32.gmra.mrb[0].mxu0 %v100
    %v275 = vpop.f32.mrb[0].mxu0
    %v276 = vadd.f32 %v75, %v275
    %v277 = vpop.f32.mrb[0].mxu0
    %278 = vmatprep.mubr.f32.mxu0 0.0
    %279 = vmatmul.mubr.f32.gmra.mrb[0].mxu0 %v103
    %v280 = vpop.f32.mrb[0].mxu0
    %v281 = vadd.f32 %v75, %v280
    %v282 = vpop.f32.mrb[0].mxu0
    %283 = vmatprep.mubr.f32.mxu0 0.0
    %284 = vmatmul.mubr.f32.gmra.mrb[0].mxu0 %v106
    %v285 = vpop.f32.mrb[0].mxu0
    %v286 = vadd.f32 %v75, %v285
    %v287 = vpop.f32.mrb[0].mxu0
    %288 = vmatprep.mubr.f32.mxu0 0.0
    %289 = vmatmul.mubr.f32.gmra.mrb[0].mxu0 %v109
    %v290 = vpop.f32.mrb[0].mxu0
    %v291 = vadd.f32 %v75, %v290
    %v292 = vpop.f32.mrb[0].mxu0
    %293 = vmatprep.mubr.f32.mxu0 0.0
    %294 = vmatmul.mubr.f32.gmra.mrb[0].mxu0 %v112
    %v295 = vpop.f32.mrb[0].mxu0
    %v296 = vadd.f32 %v75, %v295
    %v297 = vpop.f32.mrb[0].mxu0
    %298 = vmatprep.mubr.f32.mxu0 0.0
    %299 = vmatmul.mubr.f32.gmra.mrb[0].mxu0 %v115
    %v300 = vpop.f32.mrb[0].mxu0
    %v301 = vadd.f32 %v75, %v300
    %v302 = vpop.f32.mrb[0].mxu0
    %303 = vmatprep.mubr.f32.mxu0 0.0
    %304 = vmatmul.mubr.f32.gmra.mrb[0].mxu0 %v118
    %v305 = vpop.f32.mrb[0].mxu0
    %v306 = vadd.f32 %v75, %v305
    %v307 = vpop.f32.mrb[0].mxu0
    %308 = vmatprep.mubr.f32.mxu0 0.0
    %309 = vmatmul.mubr.f32.gmra.mrb[0].mxu0 %v121
    %v310 = vpop.f32.mrb[0].mxu0
    %v311 = vadd.f32 %v75, %v310
    %v312 = vpop.f32.mrb[0].mxu0
    %313 = vmatprep.mubr.f32.mxu0 0.0
    %314 = vmatmul.mubr.f32.gmra.mrb[0].mxu0 %v124
    %v315 = vpop.f32.mrb[0].mxu0
    %v316 = vadd.f32 %v75, %v315
    %v317 = vpop.f32.mrb[0].mxu0
    %318 = vmatprep.mubr.f32.mxu0 0.0
    %319 = vmatmul.mubr.f32.gmra.mrb[0].mxu0 %v127
    %v320 = vpop.f32.mrb[0].mxu0
    %v321 = vadd.f32 %v75, %v320
    %v322 = vpop.f32.mrb[0].mxu0
    %323 = vmatprep.mubr.f32.mxu0 0.0
    %324 = vmatmul.mubr.f32.gmra.mrb[0].mxu0 %v130
    %v325 = vpop.f32.mrb[0].mxu0
    %v326 = vadd.f32 %v75, %v325
    %v327 = vpop.f32.mrb[0].mxu0
    %328 = vmatprep.mubr.f32.mxu0 0.0
    %329 = vmatmul.mubr.f32.gmra.mrb[0].mxu0 %v133
    %v330 = vpop.f32.mrb[0].mxu0
    %v331 = vadd.f32 %v75, %v330
    %v332 = vpop.f32.mrb[0].mxu0
    %333 = vmatprep.mubr.f32.mxu0 0.0
    %334 = vmatmul.mubr.f32.gmra.mrb[0].mxu0 %v136
    %v335 = vpop.f32.mrb[0].mxu0
    %v336 = vadd.f32 %v75, %v335
    %v337 = vpop.f32.mrb[0].mxu0
    %338 = vmatprep.mubr.f32.mxu0 0.0
    %339 = vmatmul.mubr.f32.gmra.mrb[0].mxu0 %v139
    %v340 = vpop.f32.mrb[0].mxu0
    %v341 = vadd.f32 %v75, %v340
    %v342 = vpop.f32.mrb[0].mxu0
    %343 = vmatprep.mubr.f32.mxu0 0.0
    %344 = vmatmul.mubr.f32.gmra.mrb[0].mxu0 %v142
    %v345 = vpop.f32.mrb[0].mxu0
    %v346 = vadd.f32 %v75, %v345
    %v347 = vpop.f32.mrb[0].mxu0
    %348 = vmatprep.mubr.f32.mxu0 0.0
    %349 = vmatmul.mubr.f32.gmra.mrb[0].mxu0 %v145
    %v350 = vpop.f32.mrb[0].mxu0
    %v351 = vadd.f32 %v75, %v350
    %v352 = vpop.f32.mrb[0].mxu0
    %353 = vmatprep.mubr.f32.mxu0 0.0
    %354 = vmatmul.mubr.f32.gmra.mrb[0].mxu0 %v148
    %v355 = vpop.f32.mrb[0].mxu0
    %v356 = vadd.f32 %v75, %v355
    %v357 = vpop.f32.mrb[0].mxu0
    %358 = vmatprep.mubr.f32.mxu0 0.0
    %359 = vmatmul.mubr.f32.gmra.mrb[0].mxu0 %v151
    %v360 = vpop.f32.mrb[0].mxu0
    %v361 = vadd.f32 %v75, %v360
    %v362 = vpop.f32.mrb[0].mxu0
    %363 = vmatprep.mubr.f32.mxu0 0.0
    %364 = vmatmul.mubr.f32.gmra.mrb[0].mxu0 %v154
    %v365 = vpop.f32.mrb[0].mxu0
    %v366 = vadd.f32 %v75, %v365
    %v367 = vpop.f32.mrb[0].mxu0
    %368 = vmatprep.mubr.f32.mxu0 0.0
    %369 = vmatmul.mubr.f32.gmra.mrb[0].mxu0 %v157
    %v370 = vpop.f32.mrb[0].mxu0
    %v371 = vadd.f32 %v75, %v370
    %v372 = vpop.f32.mrb[0].mxu0
    %373 = vmatprep.mubr.f32.mxu0 0.0
    %374 = vmatmul.mubr.f32.gmra.mrb[0].mxu0 %v160
    %v375 = vpop.f32.mrb[0].mxu0
    %v376 = vadd.f32 %v75, %v375
    %v377 = vpop.f32.mrb[0].mxu0
    %378 = vmatprep.mubr.f32.mxu0 0.0
    %379 = vmatmul.mubr.f32.gmra.mrb[0].mxu0 %v163
    %v380 = vpop.f32.mrb[0].mxu0
    %v381 = vadd.f32 %v75, %v380
    %v382 = vpop.f32.mrb[0].mxu0
    %383 = vmatprep.mubr.f32.mxu0 0.0
    %384 = vmatmul.mubr.f32.gmra.mrb[0].mxu0 %v166
    %v385 = vpop.f32.mrb[0].mxu0
    %v386 = vadd.f32 %v75, %v385
    %v387 = vpop.f32.mrb[0].mxu0
    %388 = vmatprep.mubr.f32.mxu0 0.0
    %389 = vmatmul.mubr.f32.gmra.mrb[0].mxu0 %v169
    %v390 = vpop.f32.mrb[0].mxu0
    %v391 = vadd.f32 %v75, %v390
    %v392 = vpop.f32.mrb[0].mxu0
    %393 = vmatprep.mubr.f32.mxu0 0.0
    %394 = vmatmul.mubr.f32.gmra.mrb[0].mxu0 %v172
    %v395 = vpop.f32.mrb[0].mxu0
    %v396 = vadd.f32 %v75, %v395
    %v397 = vpop.f32.mrb[0].mxu0
    %398 = vdwg.mxu0
    %v399 = vtanh.pop %v241
    %v400 = vtanh.pop %v246
    %v401 = vtanh.pop %v251
    %v402 = vtanh.pop %v256
    %v403 = vtanh.pop %v261
    %v404 = vtanh.pop %v266
    %v405 = vtanh.pop %v271
    %v406 = vtanh.pop %v276
    %v407 = vtanh.pop %v281
    %v408 = vtanh.pop %v286
    %v409 = vtanh.pop %v291
    %v410 = vtanh.pop %v296
    %v411 = vtanh.pop %v301
    %v412 = vtanh.pop %v306
    %v413 = vtanh.pop %v311
    %v414 = vtanh.pop %v316
    %v415 = vtanh.pop %v321
    %v416 = vtanh.pop %v326
    %v417 = vtanh.pop %v331
    %v418 = vtanh.pop %v336
    %v419 = vtanh.pop %v341
    %v420 = vtanh.pop %v346
    %v421 = vtanh.pop %v351
    %v422 = vtanh.pop %v356
    %v423 = vtanh.pop %v361
    %v424 = vtanh.pop %v366
    %v425 = vtanh.pop %v371
    %v426 = vtanh.pop %v376
    %v427 = vtanh.pop %v381
    %v428 = vtanh.pop %v386
    %v429 = vtanh.pop %v391
    %v430 = vtanh.pop %v396
    %v431 = vld [vmem:[%s3] sm:$0xff]
    %v432 = vld [vmem:[%s3 + $0x8] sm:$0xff]
    %v433 = vld [vmem:[%s3 + $0x10] sm:$0xff]
    %v434 = vld [vmem:[%s3 + $0x18] sm:$0xff]
    %v435 = vld [vmem:[%s7 + $0x2] sm:$0x1]
    %v437 = vlaneseq
    %v438 = vshrl.u32 %v437, 7
    %v439 = vsub.s32 0, %v438
    %v440 = vrot.slane %v435, %v439
    %vm442 = vcmask 261120
    %v444 = vsel %vm442, %v399, 0
    %v447 = vsel %vm442, %v400, 0
    %v450 = vsel %vm442, %v401, 0
    %v453 = vsel %vm442, %v402, 0
    %v456 = vsel %vm442, %v403, 0
    %v459 = vsel %vm442, %v404, 0
    %v462 = vsel %vm442, %v405, 0
    %v465 = vsel %vm442, %v406, 0
    %v468 = vsel %vm442, %v407, 0
    %v471 = vsel %vm442, %v408, 0
    %v474 = vsel %vm442, %v409, 0
    %v477 = vsel %vm442, %v410, 0
    %v480 = vsel %vm442, %v411, 0
    %v483 = vsel %vm442, %v412, 0
    %v486 = vsel %vm442, %v413, 0
    %v489 = vsel %vm442, %v414, 0
    %v492 = vsel %vm442, %v415, 0
    %v495 = vsel %vm442, %v416, 0
    %v498 = vsel %vm442, %v417, 0
    %v501 = vsel %vm442, %v418, 0
    %v504 = vsel %vm442, %v419, 0
    %v507 = vsel %vm442, %v420, 0
    %v510 = vsel %vm442, %v421, 0
    %v513 = vsel %vm442, %v422, 0
    %v516 = vsel %vm442, %v423, 0
    %v519 = vsel %vm442, %v424, 0
    %v522 = vsel %vm442, %v425, 0
    %v525 = vsel %vm442, %v426, 0
    %v528 = vsel %vm442, %v427, 0
    %v531 = vsel %vm442, %v428, 0
    %v534 = vsel %vm442, %v429, 0
    %v537 = vsel %vm442, %v430, 0
    %539 = vmatprep.subr.mxu0 0.0
    %540 = vmatpush1.msra.mxu0 %v431
    %541 = vmatprep.subr.mxu0 0.0
    %542 = vmatpush1.msra.mxu0 %v432
    %543 = vmatprep.subr.mxu0 0.0
    %544 = vmatpush1.msra.mxu0 %v433
    %545 = vmatprep.subr.mxu0 0.0
    %546 = vmatpush1.msra.mxu0 %v434
    %547 = vmatprep.subr.mxu0 0.0
    %548 = vmatpush1.msra.mxu0 0.0
    %549 = vmatprep.subr.mxu0 0.0
    %550 = vmatpush1.msra.mxu0 0.0
    %551 = vmatprep.subr.mxu0 0.0
    %552 = vmatpush1.msra.mxu0 0.0
    %553 = vmatprep.subr.mxu0 0.0
    %554 = vmatpush1.msra.mxu0 0.0
    %555 = vmatprep.subr.mxu0 0.0
    %556 = vmatpush1.msra.mxu0 0.0
    %557 = vmatprep.subr.mxu0 0.0
    %558 = vmatpush1.msra.mxu0 0.0
    %559 = vmatprep.subr.mxu0 0.0
    %560 = vmatpush1.msra.mxu0 0.0
    %561 = vmatprep.subr.mxu0 0.0
    %562 = vmatpush1.msra.mxu0 0.0
    %563 = vmatprep.subr.mxu0 0.0
    %564 = vmatpush1.msra.mxu0 0.0
    %565 = vmatprep.subr.mxu0 0.0
    %566 = vmatpush1.msra.mxu0 0.0
    %567 = vmatprep.subr.mxu0 0.0
    %568 = vmatpush1.msra.mxu0 0.0
    %569 = vmatprep.subr.mxu0 0.0
    %570 = vmatpush1.msra.mxu0 0.0
    %571 = vmatprep.subr.mxu0 0.0
    %572 = vmatpush1.msra.mxu0 0.0
    %573 = vmatprep.subr.mxu0 0.0
    %574 = vmatpush1.msra.mxu0 0.0
    %575 = vmatprep.subr.mxu0 0.0
    %576 = vmatpush1.msra.mxu0 0.0
    %577 = vmatprep.subr.mxu0 0.0
    %578 = vmatpush1.msra.mxu0 0.0
    %579 = vmatprep.subr.mxu0 0.0
    %580 = vmatpush1.msra.mxu0 0.0
    %581 = vmatprep.subr.mxu0 0.0
    %582 = vmatpush1.msra.mxu0 0.0
    %583 = vmatprep.subr.mxu0 0.0
    %584 = vmatpush1.msra.mxu0 0.0
    %585 = vmatprep.subr.mxu0 0.0
    %586 = vmatpush1.msra.mxu0 0.0
    %587 = vmatprep.subr.mxu0 0.0
    %588 = vmatpush1.msra.mxu0 0.0
    %589 = vmatprep.subr.mxu0 0.0
    %590 = vmatpush1.msra.mxu0 0.0
    %591 = vmatprep.subr.mxu0 0.0
    %592 = vmatpush1.msra.mxu0 0.0
    %593 = vmatprep.subr.mxu0 0.0
    %594 = vmatpush1.msra.mxu0 0.0
    %595 = vmatprep.subr.mxu0 0.0
    %596 = vmatpush1.msra.mxu0 0.0
    %597 = vmatprep.subr.mxu0 0.0
    %598 = vmatpush1.msra.mxu0 0.0
    %599 = vmatprep.subr.mxu0 0.0
    %600 = vmatpush1.msra.mxu0 0.0
    %601 = vmatprep.subr.mxu0 0.0
    %602 = vmatpush1.msra.mxu0 0.0
    %603 = vmatprep.mubr.f32.mxu0 0.0
    %604 = vmatmul.mubr.f32.gmra.mrb[0].mxu0 %v444
    %v605 = vpop.f32.mrb[0].mxu0
    %v606 = vadd.f32 %v440, %v605
    %v607 = vpop.f32.mrb[0].mxu0
    %608 = vmatprep.mubr.f32.mxu0 0.0
    %609 = vmatmul.mubr.f32.gmra.mrb[0].mxu0 %v447
    %v610 = vpop.f32.mrb[0].mxu0
    %v611 = vadd.f32 %v440, %v610
    %v612 = vpop.f32.mrb[0].mxu0
    %613 = vmatprep.mubr.f32.mxu0 0.0
    %614 = vmatmul.mubr.f32.gmra.mrb[0].mxu0 %v450
    %v615 = vpop.f32.mrb[0].mxu0
    %v616 = vadd.f32 %v440, %v615
    %v617 = vpop.f32.mrb[0].mxu0
    %618 = vmatprep.mubr.f32.mxu0 0.0
    %619 = vmatmul.mubr.f32.gmra.mrb[0].mxu0 %v453
    %v620 = vpop.f32.mrb[0].mxu0
    %v621 = vadd.f32 %v440, %v620
    %v622 = vpop.f32.mrb[0].mxu0
    %623 = vmatprep.mubr.f32.mxu0 0.0
    %624 = vmatmul.mubr.f32.gmra.mrb[0].mxu0 %v456
    %v625 = vpop.f32.mrb[0].mxu0
    %v626 = vadd.f32 %v440, %v625
    %v627 = vpop.f32.mrb[0].mxu0
    %628 = vmatprep.mubr.f32.mxu0 0.0
    %629 = vmatmul.mubr.f32.gmra.mrb[0].mxu0 %v459
    %v630 = vpop.f32.mrb[0].mxu0
    %v631 = vadd.f32 %v440, %v630
    %v632 = vpop.f32.mrb[0].mxu0
    %633 = vmatprep.mubr.f32.mxu0 0.0
    %634 = vmatmul.mubr.f32.gmra.mrb[0].mxu0 %v462
    %v635 = vpop.f32.mrb[0].mxu0
    %v636 = vadd.f32 %v440, %v635
    %v637 = vpop.f32.mrb[0].mxu0
    %638 = vmatprep.mubr.f32.mxu0 0.0
    %639 = vmatmul.mubr.f32.gmra.mrb[0].mxu0 %v465
    %v640 = vpop.f32.mrb[0].mxu0
    %v641 = vadd.f32 %v440, %v640
    %v642 = vpop.f32.mrb[0].mxu0
    %643 = vmatprep.mubr.f32.mxu0 0.0
    %644 = vmatmul.mubr.f32.gmra.mrb[0].mxu0 %v468
    %v645 = vpop.f32.mrb[0].mxu0
    %v646 = vadd.f32 %v440, %v645
    %v647 = vpop.f32.mrb[0].mxu0
    %648 = vmatprep.mubr.f32.mxu0 0.0
    %649 = vmatmul.mubr.f32.gmra.mrb[0].mxu0 %v471
    %v650 = vpop.f32.mrb[0].mxu0
    %v651 = vadd.f32 %v440, %v650
    %v652 = vpop.f32.mrb[0].mxu0
    %653 = vmatprep.mubr.f32.mxu0 0.0
    %654 = vmatmul.mubr.f32.gmra.mrb[0].mxu0 %v474
    %v655 = vpop.f32.mrb[0].mxu0
    %v656 = vadd.f32 %v440, %v655
    %v657 = vpop.f32.mrb[0].mxu0
    %658 = vmatprep.mubr.f32.mxu0 0.0
    %659 = vmatmul.mubr.f32.gmra.mrb[0].mxu0 %v477
    %v660 = vpop.f32.mrb[0].mxu0
    %v661 = vadd.f32 %v440, %v660
    %v662 = vpop.f32.mrb[0].mxu0
    %663 = vmatprep.mubr.f32.mxu0 0.0
    %664 = vmatmul.mubr.f32.gmra.mrb[0].mxu0 %v480
    %v665 = vpop.f32.mrb[0].mxu0
    %v666 = vadd.f32 %v440, %v665
    %v667 = vpop.f32.mrb[0].mxu0
    %668 = vmatprep.mubr.f32.mxu0 0.0
    %669 = vmatmul.mubr.f32.gmra.mrb[0].mxu0 %v483
    %v670 = vpop.f32.mrb[0].mxu0
    %v671 = vadd.f32 %v440, %v670
    %v672 = vpop.f32.mrb[0].mxu0
    %673 = vmatprep.mubr.f32.mxu0 0.0
    %674 = vmatmul.mubr.f32.gmra.mrb[0].mxu0 %v486
    %v675 = vpop.f32.mrb[0].mxu0
    %v676 = vadd.f32 %v440, %v675
    %v677 = vpop.f32.mrb[0].mxu0
    %678 = vmatprep.mubr.f32.mxu0 0.0
    %679 = vmatmul.mubr.f32.gmra.mrb[0].mxu0 %v489
    %v680 = vpop.f32.mrb[0].mxu0
    %v681 = vadd.f32 %v440, %v680
    %v682 = vpop.f32.mrb[0].mxu0
    %683 = vmatprep.mubr.f32.mxu0 0.0
    %684 = vmatmul.mubr.f32.gmra.mrb[0].mxu0 %v492
    %v685 = vpop.f32.mrb[0].mxu0
    %v686 = vadd.f32 %v440, %v685
    %v687 = vpop.f32.mrb[0].mxu0
    %688 = vmatprep.mubr.f32.mxu0 0.0
    %689 = vmatmul.mubr.f32.gmra.mrb[0].mxu0 %v495
    %v690 = vpop.f32.mrb[0].mxu0
    %v691 = vadd.f32 %v440, %v690
    %v692 = vpop.f32.mrb[0].mxu0
    %693 = vmatprep.mubr.f32.mxu0 0.0
    %694 = vmatmul.mubr.f32.gmra.mrb[0].mxu0 %v498
    %v695 = vpop.f32.mrb[0].mxu0
    %v696 = vadd.f32 %v440, %v695
    %v697 = vpop.f32.mrb[0].mxu0
    %698 = vmatprep.mubr.f32.mxu0 0.0
    %699 = vmatmul.mubr.f32.gmra.mrb[0].mxu0 %v501
    %v700 = vpop.f32.mrb[0].mxu0
    %v701 = vadd.f32 %v440, %v700
    %v702 = vpop.f32.mrb[0].mxu0
    %703 = vmatprep.mubr.f32.mxu0 0.0
    %704 = vmatmul.mubr.f32.gmra.mrb[0].mxu0 %v504
    %v705 = vpop.f32.mrb[0].mxu0
    %v706 = vadd.f32 %v440, %v705
    %v707 = vpop.f32.mrb[0].mxu0
    %708 = vmatprep.mubr.f32.mxu0 0.0
    %709 = vmatmul.mubr.f32.gmra.mrb[0].mxu0 %v507
    %v710 = vpop.f32.mrb[0].mxu0
    %v711 = vadd.f32 %v440, %v710
    %v712 = vpop.f32.mrb[0].mxu0
    %713 = vmatprep.mubr.f32.mxu0 0.0
    %714 = vmatmul.mubr.f32.gmra.mrb[0].mxu0 %v510
    %v715 = vpop.f32.mrb[0].mxu0
    %v716 = vadd.f32 %v440, %v715
    %v717 = vpop.f32.mrb[0].mxu0
    %718 = vmatprep.mubr.f32.mxu0 0.0
    %719 = vmatmul.mubr.f32.gmra.mrb[0].mxu0 %v513
    %v720 = vpop.f32.mrb[0].mxu0
    %v721 = vadd.f32 %v440, %v720
    %v722 = vpop.f32.mrb[0].mxu0
    %723 = vmatprep.mubr.f32.mxu0 0.0
    %724 = vmatmul.mubr.f32.gmra.mrb[0].mxu0 %v516
    %v725 = vpop.f32.mrb[0].mxu0
    %v726 = vadd.f32 %v440, %v725
    %v727 = vpop.f32.mrb[0].mxu0
    %728 = vmatprep.mubr.f32.mxu0 0.0
    %729 = vmatmul.mubr.f32.gmra.mrb[0].mxu0 %v519
    %v730 = vpop.f32.mrb[0].mxu0
    %v731 = vadd.f32 %v440, %v730
    %v732 = vpop.f32.mrb[0].mxu0
    %733 = vmatprep.mubr.f32.mxu0 0.0
    %734 = vmatmul.mubr.f32.gmra.mrb[0].mxu0 %v522
    %v735 = vpop.f32.mrb[0].mxu0
    %v736 = vadd.f32 %v440, %v735
    %v737 = vpop.f32.mrb[0].mxu0
    %738 = vmatprep.mubr.f32.mxu0 0.0
    %739 = vmatmul.mubr.f32.gmra.mrb[0].mxu0 %v525
    %v740 = vpop.f32.mrb[0].mxu0
    %v741 = vadd.f32 %v440, %v740
    %v742 = vpop.f32.mrb[0].mxu0
    %743 = vmatprep.mubr.f32.mxu0 0.0
    %744 = vmatmul.mubr.f32.gmra.mrb[0].mxu0 %v528
    %v745 = vpop.f32.mrb[0].mxu0
    %v746 = vadd.f32 %v440, %v745
    %v747 = vpop.f32.mrb[0].mxu0
    %748 = vmatprep.mubr.f32.mxu0 0.0
    %749 = vmatmul.mubr.f32.gmra.mrb[0].mxu0 %v531
    %v750 = vpop.f32.mrb[0].mxu0
    %v751 = vadd.f32 %v440, %v750
    %v752 = vpop.f32.mrb[0].mxu0
    %753 = vmatprep.mubr.f32.mxu0 0.0
    %754 = vmatmul.mubr.f32.gmra.mrb[0].mxu0 %v534
    %v755 = vpop.f32.mrb[0].mxu0
    %v756 = vadd.f32 %v440, %v755
    %v757 = vpop.f32.mrb[0].mxu0
    %758 = vmatprep.mubr.f32.mxu0 0.0
    %759 = vmatmul.mubr.f32.gmra.mrb[0].mxu0 %v537
    %v760 = vpop.f32.mrb[0].mxu0
    %v761 = vadd.f32 %v440, %v760
    %v762 = vpop.f32.mrb[0].mxu0
    %763 = vdwg.mxu0
    %v764 = vtanh.pop %v606
    %v765 = vtanh.pop %v611
    %v766 = vtanh.pop %v616
    %v767 = vtanh.pop %v621
    %v768 = vtanh.pop %v626
    %v769 = vtanh.pop %v631
    %v770 = vtanh.pop %v636
    %v771 = vtanh.pop %v641
    %v772 = vtanh.pop %v646
    %v773 = vtanh.pop %v651
    %v774 = vtanh.pop %v656
    %v775 = vtanh.pop %v661
    %v776 = vtanh.pop %v666
    %v777 = vtanh.pop %v671
    %v778 = vtanh.pop %v676
    %v779 = vtanh.pop %v681
    %v780 = vtanh.pop %v686
    %v781 = vtanh.pop %v691
    %v782 = vtanh.pop %v696
    %v783 = vtanh.pop %v701
    %v784 = vtanh.pop %v706
    %v785 = vtanh.pop %v711
    %v786 = vtanh.pop %v716
    %v787 = vtanh.pop %v721
    %v788 = vtanh.pop %v726
    %v789 = vtanh.pop %v731
    %v790 = vtanh.pop %v736
    %v791 = vtanh.pop %v741
    %v792 = vtanh.pop %v746
    %v793 = vtanh.pop %v751
    %v794 = vtanh.pop %v756
    %v795 = vtanh.pop %v761
    %v796 = vld [vmem:[%s4] sm:$0xff]
    %v797 = vld [vmem:[%s4 + $0x8] sm:$0xff]
    %v798 = vld [vmem:[%s4 + $0x10] sm:$0xff]
    %v799 = vld [vmem:[%s4 + $0x18] sm:$0xff]
    %v800 = vld [vmem:[%s7 + $0x4] sm:$0x3]
    %v802 = vlaneseq
    %v803 = vshrl.u32 %v802, 7
    %v804 = vsub.s32 0, %v803
    %v805 = vrot.slane %v800, %v804
    %v806 = vlaneseq
    %v807 = vshrl.u32 %v806, 7
    %v808 = vsub.s32 1, %v807
    %v809 = vrot.slane %v800, %v808
    %vm812 = vcmask 130048
    %v814 = vsel %vm812, %v764, 0
    %v817 = vsel %vm812, %v765, 0
    %v820 = vsel %vm812, %v766, 0
    %v823 = vsel %vm812, %v767, 0
    %v826 = vsel %vm812, %v768, 0
    %v829 = vsel %vm812, %v769, 0
    %v832 = vsel %vm812, %v770, 0
    %v835 = vsel %vm812, %v771, 0
    %v838 = vsel %vm812, %v772, 0
    %v841 = vsel %vm812, %v773, 0
    %v844 = vsel %vm812, %v774, 0
    %v847 = vsel %vm812, %v775, 0
    %v850 = vsel %vm812, %v776, 0
    %v853 = vsel %vm812, %v777, 0
    %v856 = vsel %vm812, %v778, 0
    %v859 = vsel %vm812, %v779, 0
    %v862 = vsel %vm812, %v780, 0
    %v865 = vsel %vm812, %v781, 0
    %v868 = vsel %vm812, %v782, 0
    %v871 = vsel %vm812, %v783, 0
    %v874 = vsel %vm812, %v784, 0
    %v877 = vsel %vm812, %v785, 0
    %v880 = vsel %vm812, %v786, 0
    %v883 = vsel %vm812, %v787, 0
    %v886 = vsel %vm812, %v788, 0
    %v889 = vsel %vm812, %v789, 0
    %v892 = vsel %vm812, %v790, 0
    %v895 = vsel %vm812, %v791, 0
    %v898 = vsel %vm812, %v792, 0
    %v901 = vsel %vm812, %v793, 0
    %v904 = vsel %vm812, %v794, 0
    %v907 = vsel %vm812, %v795, 0
    %909 = vmatprep.subr.mxu0 %v797
    %910 = vmatpush1.msra.mxu0 %v796
    %911 = vmatprep.subr.mxu0 %v799
    %912 = vmatpush1.msra.mxu0 %v798
    %913 = vmatprep.subr.mxu0 0.0
    %914 = vmatpush1.msra.mxu0 0.0
    %915 = vmatprep.subr.mxu0 0.0
    %916 = vmatpush1.msra.mxu0 0.0
    %917 = vmatprep.subr.mxu0 0.0
    %918 = vmatpush1.msra.mxu0 0.0
    %919 = vmatprep.subr.mxu0 0.0
    %920 = vmatpush1.msra.mxu0 0.0
    %921 = vmatprep.subr.mxu0 0.0
    %922 = vmatpush1.msra.mxu0 0.0
    %923 = vmatprep.subr.mxu0 0.0
    %924 = vmatpush1.msra.mxu0 0.0
    %925 = vmatprep.subr.mxu0 0.0
    %926 = vmatpush1.msra.mxu0 0.0
    %927 = vmatprep.subr.mxu0 0.0
    %928 = vmatpush1.msra.mxu0 0.0
    %929 = vmatprep.subr.mxu0 0.0
    %930 = vmatpush1.msra.mxu0 0.0
    %931 = vmatprep.subr.mxu0 0.0
    %932 = vmatpush1.msra.mxu0 0.0
    %933 = vmatprep.subr.mxu0 0.0
    %934 = vmatpush1.msra.mxu0 0.0
    %935 = vmatprep.subr.mxu0 0.0
    %936 = vmatpush1.msra.mxu0 0.0
    %937 = vmatprep.subr.mxu0 0.0
    %938 = vmatpush1.msra.mxu0 0.0
    %939 = vmatprep.subr.mxu0 0.0
    %940 = vmatpush1.msra.mxu0 0.0
    %941 = vmatprep.subr.mxu0 0.0
    %942 = vmatpush1.msra.mxu0 0.0
    %943 = vmatprep.subr.mxu0 0.0
    %944 = vmatpush1.msra.mxu0 0.0
    %945 = vmatprep.subr.mxu0 0.0
    %946 = vmatpush1.msra.mxu0 0.0
    %947 = vmatprep.subr.mxu0 0.0
    %948 = vmatpush1.msra.mxu0 0.0
    %949 = vmatprep.subr.mxu0 0.0
    %950 = vmatpush1.msra.mxu0 0.0
    %951 = vmatprep.subr.mxu0 0.0
    %952 = vmatpush1.msra.mxu0 0.0
    %953 = vmatprep.subr.mxu0 0.0
    %954 = vmatpush1.msra.mxu0 0.0
    %955 = vmatprep.subr.mxu0 0.0
    %956 = vmatpush1.msra.mxu0 0.0
    %957 = vmatprep.subr.mxu0 0.0
    %958 = vmatpush1.msra.mxu0 0.0
    %959 = vmatprep.subr.mxu0 0.0
    %960 = vmatpush1.msra.mxu0 0.0
    %961 = vmatprep.subr.mxu0 0.0
    %962 = vmatpush1.msra.mxu0 0.0
    %963 = vmatprep.subr.mxu0 0.0
    %964 = vmatpush1.msra.mxu0 0.0
    %965 = vmatprep.subr.mxu0 0.0
    %966 = vmatpush1.msra.mxu0 0.0
    %967 = vmatprep.subr.mxu0 0.0
    %968 = vmatpush1.msra.mxu0 0.0
    %969 = vmatprep.subr.mxu0 0.0
    %970 = vmatpush1.msra.mxu0 0.0
    %971 = vmatprep.subr.mxu0 0.0
    %972 = vmatpush1.msra.mxu0 0.0
    %973 = vmatprep.mubr.f32.mxu0 0.0
    %974 = vmatmul.mubr.f32.gmra.mrb[0].mxu0 %v814
    %v975 = vpop.f32.mrb[0].mxu0
    %v976 = vadd.f32 %v805, %v975
    %v977 = vpop.f32.mrb[0].mxu0
    %v978 = vadd.f32 %v809, %v977
    %979 = vmatprep.mubr.f32.mxu0 0.0
    %980 = vmatmul.mubr.f32.gmra.mrb[0].mxu0 %v817
    %v981 = vpop.f32.mrb[0].mxu0
    %v982 = vadd.f32 %v805, %v981
    %v983 = vpop.f32.mrb[0].mxu0
    %v984 = vadd.f32 %v809, %v983
    %985 = vmatprep.mubr.f32.mxu0 0.0
    %986 = vmatmul.mubr.f32.gmra.mrb[0].mxu0 %v820
    %v987 = vpop.f32.mrb[0].mxu0
    %v988 = vadd.f32 %v805, %v987
    %v989 = vpop.f32.mrb[0].mxu0
    %v990 = vadd.f32 %v809, %v989
    %991 = vmatprep.mubr.f32.mxu0 0.0
    %992 = vmatmul.mubr.f32.gmra.mrb[0].mxu0 %v823
    %v993 = vpop.f32.mrb[0].mxu0
    %v994 = vadd.f32 %v805, %v993
    %v995 = vpop.f32.mrb[0].mxu0
    %v996 = vadd.f32 %v809, %v995
    %997 = vmatprep.mubr.f32.mxu0 0.0
    %998 = vmatmul.mubr.f32.gmra.mrb[0].mxu0 %v826
    %v999 = vpop.f32.mrb[0].mxu0
    %v1000 = vadd.f32 %v805, %v999
    %v1001 = vpop.f32.mrb[0].mxu0
    %v1002 = vadd.f32 %v809, %v1001
    %1003 = vmatprep.mubr.f32.mxu0 0.0
    %1004 = vmatmul.mubr.f32.gmra.mrb[0].mxu0 %v829
    %v1005 = vpop.f32.mrb[0].mxu0
    %v1006 = vadd.f32 %v805, %v1005
    %v1007 = vpop.f32.mrb[0].mxu0
    %v1008 = vadd.f32 %v809, %v1007
    %1009 = vmatprep.mubr.f32.mxu0 0.0
    %1010 = vmatmul.mubr.f32.gmra.mrb[0].mxu0 %v832
    %v1011 = vpop.f32.mrb[0].mxu0
    %v1012 = vadd.f32 %v805, %v1011
    %v1013 = vpop.f32.mrb[0].mxu0
    %v1014 = vadd.f32 %v809, %v1013
    %1015 = vmatprep.mubr.f32.mxu0 0.0
    %1016 = vmatmul.mubr.f32.gmra.mrb[0].mxu0 %v835
    %v1017 = vpop.f32.mrb[0].mxu0
    %v1018 = vadd.f32 %v805, %v1017
    %v1019 = vpop.f32.mrb[0].mxu0
    %v1020 = vadd.f32 %v809, %v1019
    %1021 = vmatprep.mubr.f32.mxu0 0.0
    %1022 = vmatmul.mubr.f32.gmra.mrb[0].mxu0 %v838
    %v1023 = vpop.f32.mrb[0].mxu0
    %v1024 = vadd.f32 %v805, %v1023
    %v1025 = vpop.f32.mrb[0].mxu0
    %v1026 = vadd.f32 %v809, %v1025
    %1027 = vmatprep.mubr.f32.mxu0 0.0
    %1028 = vmatmul.mubr.f32.gmra.mrb[0].mxu0 %v841
    %v1029 = vpop.f32.mrb[0].mxu0
    %v1030 = vadd.f32 %v805, %v1029
    %v1031 = vpop.f32.mrb[0].mxu0
    %v1032 = vadd.f32 %v809, %v1031
    %1033 = vmatprep.mubr.f32.mxu0 0.0
    %1034 = vmatmul.mubr.f32.gmra.mrb[0].mxu0 %v844
    %v1035 = vpop.f32.mrb[0].mxu0
    %v1036 = vadd.f32 %v805, %v1035
    %v1037 = vpop.f32.mrb[0].mxu0
    %v1038 = vadd.f32 %v809, %v1037
    %1039 = vmatprep.mubr.f32.mxu0 0.0
    %1040 = vmatmul.mubr.f32.gmra.mrb[0].mxu0 %v847
    %v1041 = vpop.f32.mrb[0].mxu0
    %v1042 = vadd.f32 %v805, %v1041
    %v1043 = vpop.f32.mrb[0].mxu0
    %v1044 = vadd.f32 %v809, %v1043
    %1045 = vmatprep.mubr.f32.mxu0 0.0
    %1046 = vmatmul.mubr.f32.gmra.mrb[0].mxu0 %v850
    %v1047 = vpop.f32.mrb[0].mxu0
    %v1048 = vadd.f32 %v805, %v1047
    %v1049 = vpop.f32.mrb[0].mxu0
    %v1050 = vadd.f32 %v809, %v1049
    %1051 = vmatprep.mubr.f32.mxu0 0.0
    %1052 = vmatmul.mubr.f32.gmra.mrb[0].mxu0 %v853
    %v1053 = vpop.f32.mrb[0].mxu0
    %v1054 = vadd.f32 %v805, %v1053
    %v1055 = vpop.f32.mrb[0].mxu0
    %v1056 = vadd.f32 %v809, %v1055
    %1057 = vmatprep.mubr.f32.mxu0 0.0
    %1058 = vmatmul.mubr.f32.gmra.mrb[0].mxu0 %v856
    %v1059 = vpop.f32.mrb[0].mxu0
    %v1060 = vadd.f32 %v805, %v1059
    %v1061 = vpop.f32.mrb[0].mxu0
    %v1062 = vadd.f32 %v809, %v1061
    %1063 = vmatprep.mubr.f32.mxu0 0.0
    %1064 = vmatmul.mubr.f32.gmra.mrb[0].mxu0 %v859
    %v1065 = vpop.f32.mrb[0].mxu0
    %v1066 = vadd.f32 %v805, %v1065
    %v1067 = vpop.f32.mrb[0].mxu0
    %v1068 = vadd.f32 %v809, %v1067
    %1069 = vmatprep.mubr.f32.mxu0 0.0
    %1070 = vmatmul.mubr.f32.gmra.mrb[0].mxu0 %v862
    %v1071 = vpop.f32.mrb[0].mxu0
    %v1072 = vadd.f32 %v805, %v1071
    %v1073 = vpop.f32.mrb[0].mxu0
    %v1074 = vadd.f32 %v809, %v1073
    %1075 = vmatprep.mubr.f32.mxu0 0.0
    %1076 = vmatmul.mubr.f32.gmra.mrb[0].mxu0 %v865
    %v1077 = vpop.f32.mrb[0].mxu0
    %v1078 = vadd.f32 %v805, %v1077
    %v1079 = vpop.f32.mrb[0].mxu0
    %v1080 = vadd.f32 %v809, %v1079
    %1081 = vmatprep.mubr.f32.mxu0 0.0
    %1082 = vmatmul.mubr.f32.gmra.mrb[0].mxu0 %v868
    %v1083 = vpop.f32.mrb[0].mxu0
    %v1084 = vadd.f32 %v805, %v1083
    %v1085 = vpop.f32.mrb[0].mxu0
    %v1086 = vadd.f32 %v809, %v1085
    %1087 = vmatprep.mubr.f32.mxu0 0.0
    %1088 = vmatmul.mubr.f32.gmra.mrb[0].mxu0 %v871
    %v1089 = vpop.f32.mrb[0].mxu0
    %v1090 = vadd.f32 %v805, %v1089
    %v1091 = vpop.f32.mrb[0].mxu0
    %v1092 = vadd.f32 %v809, %v1091
    %1093 = vmatprep.mubr.f32.mxu0 0.0
    %1094 = vmatmul.mubr.f32.gmra.mrb[0].mxu0 %v874
    %v1095 = vpop.f32.mrb[0].mxu0
    %v1096 = vadd.f32 %v805, %v1095
    %v1097 = vpop.f32.mrb[0].mxu0
    %v1098 = vadd.f32 %v809, %v1097
    %1099 = vmatprep.mubr.f32.mxu0 0.0
    %1100 = vmatmul.mubr.f32.gmra.mrb[0].mxu0 %v877
    %v1101 = vpop.f32.mrb[0].mxu0
    %v1102 = vadd.f32 %v805, %v1101
    %v1103 = vpop.f32.mrb[0].mxu0
    %v1104 = vadd.f32 %v809, %v1103
    %1105 = vmatprep.mubr.f32.mxu0 0.0
    %1106 = vmatmul.mubr.f32.gmra.mrb[0].mxu0 %v880
    %v1107 = vpop.f32.mrb[0].mxu0
    %v1108 = vadd.f32 %v805, %v1107
    %v1109 = vpop.f32.mrb[0].mxu0
    %v1110 = vadd.f32 %v809, %v1109
    %1111 = vmatprep.mubr.f32.mxu0 0.0
    %1112 = vmatmul.mubr.f32.gmra.mrb[0].mxu0 %v883
    %v1113 = vpop.f32.mrb[0].mxu0
    %v1114 = vadd.f32 %v805, %v1113
    %v1115 = vpop.f32.mrb[0].mxu0
    %v1116 = vadd.f32 %v809, %v1115
    %1117 = vmatprep.mubr.f32.mxu0 0.0
    %1118 = vmatmul.mubr.f32.gmra.mrb[0].mxu0 %v886
    %v1119 = vpop.f32.mrb[0].mxu0
    %v1120 = vadd.f32 %v805, %v1119
    %v1121 = vpop.f32.mrb[0].mxu0
    %v1122 = vadd.f32 %v809, %v1121
    %1123 = vmatprep.mubr.f32.mxu0 0.0
    %1124 = vmatmul.mubr.f32.gmra.mrb[0].mxu0 %v889
    %v1125 = vpop.f32.mrb[0].mxu0
    %v1126 = vadd.f32 %v805, %v1125
    %v1127 = vpop.f32.mrb[0].mxu0
    %v1128 = vadd.f32 %v809, %v1127
    %1129 = vmatprep.mubr.f32.mxu0 0.0
    %1130 = vmatmul.mubr.f32.gmra.mrb[0].mxu0 %v892
    %v1131 = vpop.f32.mrb[0].mxu0
    %v1132 = vadd.f32 %v805, %v1131
    %v1133 = vpop.f32.mrb[0].mxu0
    %v1134 = vadd.f32 %v809, %v1133
    %1135 = vmatprep.mubr.f32.mxu0 0.0
    %1136 = vmatmul.mubr.f32.gmra.mrb[0].mxu0 %v895
    %v1137 = vpop.f32.mrb[0].mxu0
    %v1138 = vadd.f32 %v805, %v1137
    %v1139 = vpop.f32.mrb[0].mxu0
    %v1140 = vadd.f32 %v809, %v1139
    %1141 = vmatprep.mubr.f32.mxu0 0.0
    %1142 = vmatmul.mubr.f32.gmra.mrb[0].mxu0 %v898
    %v1143 = vpop.f32.mrb[0].mxu0
    %v1144 = vadd.f32 %v805, %v1143
    %v1145 = vpop.f32.mrb[0].mxu0
    %v1146 = vadd.f32 %v809, %v1145
    %1147 = vmatprep.mubr.f32.mxu0 0.0
    %1148 = vmatmul.mubr.f32.gmra.mrb[0].mxu0 %v901
    %v1149 = vpop.f32.mrb[0].mxu0
    %v1150 = vadd.f32 %v805, %v1149
    %v1151 = vpop.f32.mrb[0].mxu0
    %v1152 = vadd.f32 %v809, %v1151
    %1153 = vmatprep.mubr.f32.mxu0 0.0
    %1154 = vmatmul.mubr.f32.gmra.mrb[0].mxu0 %v904
    %v1155 = vpop.f32.mrb[0].mxu0
    %v1156 = vadd.f32 %v805, %v1155
    %v1157 = vpop.f32.mrb[0].mxu0
    %v1158 = vadd.f32 %v809, %v1157
    %1159 = vmatprep.mubr.f32.mxu0 0.0
    %1160 = vmatmul.mubr.f32.gmra.mrb[0].mxu0 %v907
    %v1161 = vpop.f32.mrb[0].mxu0
    %v1162 = vadd.f32 %v805, %v1161
    %v1163 = vpop.f32.mrb[0].mxu0
    %v1164 = vadd.f32 %v809, %v1163
    %1165 = vdwg.mxu0
    %v1166 = vmul.f32 %v978, 1.442695
    %v1167 = vpow.pop %v1166
    %v1168 = vmul.f32 %v984, 1.442695
    %v1169 = vpow.pop %v1168
    %v1170 = vmul.f32 %v990, 1.442695
    %v1171 = vpow.pop %v1170
    %v1172 = vmul.f32 %v996, 1.442695
    %v1173 = vpow.pop %v1172
    %v1174 = vmul.f32 %v1002, 1.442695
    %v1175 = vpow.pop %v1174
    %v1176 = vmul.f32 %v1008, 1.442695
    %v1177 = vpow.pop %v1176
    %v1178 = vmul.f32 %v1014, 1.442695
    %v1179 = vpow.pop %v1178
    %v1180 = vmul.f32 %v1020, 1.442695
    %v1181 = vpow.pop %v1180
    %v1182 = vmul.f32 %v1026, 1.442695
    %v1183 = vpow.pop %v1182
    %v1184 = vmul.f32 %v1032, 1.442695
    %v1185 = vpow.pop %v1184
    %v1186 = vmul.f32 %v1038, 1.442695
    %v1187 = vpow.pop %v1186
    %v1188 = vmul.f32 %v1044, 1.442695
    %v1189 = vpow.pop %v1188
    %v1190 = vmul.f32 %v1050, 1.442695
    %v1191 = vpow.pop %v1190
    %v1192 = vmul.f32 %v1056, 1.442695
    %v1193 = vpow.pop %v1192
    %v1194 = vmul.f32 %v1062, 1.442695
    %v1195 = vpow.pop %v1194
    %v1196 = vmul.f32 %v1068, 1.442695
    %v1197 = vpow.pop %v1196
    %v1198 = vmul.f32 %v1074, 1.442695
    %v1199 = vpow.pop %v1198
    %v1200 = vmul.f32 %v1080, 1.442695
    %v1201 = vpow.pop %v1200
    %v1202 = vmul.f32 %v1086, 1.442695
    %v1203 = vpow.pop %v1202
    %v1204 = vmul.f32 %v1092, 1.442695
    %v1205 = vpow.pop %v1204
    %v1206 = vmul.f32 %v1098, 1.442695
    %v1207 = vpow.pop %v1206
    %v1208 = vmul.f32 %v1104, 1.442695
    %v1209 = vpow.pop %v1208
    %v1210 = vmul.f32 %v1110, 1.442695
    %v1211 = vpow.pop %v1210
    %v1212 = vmul.f32 %v1116, 1.442695
    %v1213 = vpow.pop %v1212
    %v1214 = vmul.f32 %v1122, 1.442695
    %v1215 = vpow.pop %v1214
    %v1216 = vmul.f32 %v1128, 1.442695
    %v1217 = vpow.pop %v1216
    %v1218 = vmul.f32 %v1134, 1.442695
    %v1219 = vpow.pop %v1218
    %v1220 = vmul.f32 %v1140, 1.442695
    %v1221 = vpow.pop %v1220
    %v1222 = vmul.f32 %v1146, 1.442695
    %v1223 = vpow.pop %v1222
    %v1224 = vmul.f32 %v1152, 1.442695
    %v1225 = vpow.pop %v1224
    %v1226 = vmul.f32 %v1158, 1.442695
    %v1227 = vpow.pop %v1226
    %v1228 = vmul.f32 %v1164, 1.442695
    %v1229 = vpow.pop %v1228
    %v1230 = vld [vmem:[%s1] sm:$0xff]
    %v1231 = vld [vmem:[%s1 + $0x8] sm:$0xff]
    %v1232 = vld [vmem:[%s1 + $0x10] sm:$0xff]
    %v1233 = vld [vmem:[%s1 + $0x18] sm:$0xff]
    %v1234 = vld [vmem:[%s1 + $0x20] sm:$0xff]
    %v1235 = vld [vmem:[%s1 + $0x28] sm:$0xff]
    %v1236 = vld [vmem:[%s1 + $0x30] sm:$0xff]
    %v1237 = vld [vmem:[%s1 + $0x38] sm:$0xff]
    %v1238 = vld [vmem:[%s1 + $0x40] sm:$0xff]
    %v1239 = vld [vmem:[%s1 + $0x48] sm:$0xff]
    %v1240 = vld [vmem:[%s1 + $0x50] sm:$0xff]
    %v1241 = vld [vmem:[%s1 + $0x58] sm:$0xff]
    %v1242 = vld [vmem:[%s1 + $0x60] sm:$0xff]
    %v1243 = vld [vmem:[%s1 + $0x68] sm:$0xff]
    %v1244 = vld [vmem:[%s1 + $0x70] sm:$0xff]
    %v1245 = vld [vmem:[%s1 + $0x78] sm:$0xff]
    %v1246 = vld [vmem:[%s1 + $0x80] sm:$0xff]
    %v1247 = vld [vmem:[%s1 + $0x88] sm:$0xff]
    %v1248 = vld [vmem:[%s1 + $0x90] sm:$0xff]
    %v1249 = vld [vmem:[%s1 + $0x98] sm:$0xff]
    %v1250 = vld [vmem:[%s1 + $0xa0] sm:$0xff]
    %v1251 = vld [vmem:[%s1 + $0xa8] sm:$0xff]
    %v1252 = vld [vmem:[%s1 + $0xb0] sm:$0xff]
    %v1253 = vld [vmem:[%s1 + $0xb8] sm:$0xff]
    %v1254 = vld [vmem:[%s1 + $0xc0] sm:$0xff]
    %v1255 = vld [vmem:[%s1 + $0xc8] sm:$0xff]
    %v1256 = vld [vmem:[%s1 + $0xd0] sm:$0xff]
    %v1257 = vld [vmem:[%s1 + $0xd8] sm:$0xff]
    %v1258 = vld [vmem:[%s1 + $0xe0] sm:$0xff]
    %v1259 = vld [vmem:[%s1 + $0xe8] sm:$0xff]
    %v1260 = vld [vmem:[%s1 + $0xf0] sm:$0xff]
    %v1261 = vld [vmem:[%s1 + $0xf8] sm:$0xff]
    %v1262 = vmul.f32 %v1167, %v1230
    %v1263 = vmul.f32 %v1169, %v1231
    %v1264 = vmul.f32 %v1171, %v1232
    %v1265 = vmul.f32 %v1173, %v1233
    %v1266 = vmul.f32 %v1175, %v1234
    %v1267 = vmul.f32 %v1177, %v1235
    %v1268 = vmul.f32 %v1179, %v1236
    %v1269 = vmul.f32 %v1181, %v1237
    %v1270 = vmul.f32 %v1183, %v1238
    %v1271 = vmul.f32 %v1185, %v1239
    %v1272 = vmul.f32 %v1187, %v1240
    %v1273 = vmul.f32 %v1189, %v1241
    %v1274 = vmul.f32 %v1191, %v1242
    %v1275 = vmul.f32 %v1193, %v1243
    %v1276 = vmul.f32 %v1195, %v1244
    %v1277 = vmul.f32 %v1197, %v1245
    %v1278 = vmul.f32 %v1199, %v1246
    %v1279 = vmul.f32 %v1201, %v1247
    %v1280 = vmul.f32 %v1203, %v1248
    %v1281 = vmul.f32 %v1205, %v1249
    %v1282 = vmul.f32 %v1207, %v1250
    %v1283 = vmul.f32 %v1209, %v1251
    %v1284 = vmul.f32 %v1211, %v1252
    %v1285 = vmul.f32 %v1213, %v1253
    %v1286 = vmul.f32 %v1215, %v1254
    %v1287 = vmul.f32 %v1217, %v1255
    %v1288 = vmul.f32 %v1219, %v1256
    %v1289 = vmul.f32 %v1221, %v1257
    %v1290 = vmul.f32 %v1223, %v1258
    %v1291 = vmul.f32 %v1225, %v1259
    %v1292 = vmul.f32 %v1227, %v1260
    %v1293 = vmul.f32 %v1229, %v1261
    %v1294 = vadd.f32 %v976, %v1262
    %v1295 = vadd.f32 %v982, %v1263
    %v1296 = vadd.f32 %v988, %v1264
    %v1297 = vadd.f32 %v994, %v1265
    %v1298 = vadd.f32 %v1000, %v1266
    %v1299 = vadd.f32 %v1006, %v1267
    %v1300 = vadd.f32 %v1012, %v1268
    %v1301 = vadd.f32 %v1018, %v1269
    %v1302 = vadd.f32 %v1024, %v1270
    %v1303 = vadd.f32 %v1030, %v1271
    %v1304 = vadd.f32 %v1036, %v1272
    %v1305 = vadd.f32 %v1042, %v1273
    %v1306 = vadd.f32 %v1048, %v1274
    %v1307 = vadd.f32 %v1054, %v1275
    %v1308 = vadd.f32 %v1060, %v1276
    %v1309 = vadd.f32 %v1066, %v1277
    %v1310 = vadd.f32 %v1072, %v1278
    %v1311 = vadd.f32 %v1078, %v1279
    %v1312 = vadd.f32 %v1084, %v1280
    %v1313 = vadd.f32 %v1090, %v1281
    %v1314 = vadd.f32 %v1096, %v1282
    %v1315 = vadd.f32 %v1102, %v1283
    %v1316 = vadd.f32 %v1108, %v1284
    %v1317 = vadd.f32 %v1114, %v1285
    %v1318 = vadd.f32 %v1120, %v1286
    %v1319 = vadd.f32 %v1126, %v1287
    %v1320 = vadd.f32 %v1132, %v1288
    %v1321 = vadd.f32 %v1138, %v1289
    %v1322 = vadd.f32 %v1144, %v1290
    %v1323 = vadd.f32 %v1150, %v1291
    %v1324 = vadd.f32 %v1156, %v1292
    %v1325 = vadd.f32 %v1162, %v1293
    %v1326 = vld [vmem:[%s5] sm:$0xff]
    %v1327 = vld [vmem:[%s5 + $0x8] sm:$0xff]
    %v1328 = vld [vmem:[%s5 + $0x10] sm:$0xff]
    %v1329 = vld [vmem:[%s5 + $0x18] sm:$0xff]
    %v1330 = vld [vmem:[%s5 + $0x20] sm:$0xff]
    %v1331 = vld [vmem:[%s5 + $0x28] sm:$0xff]
    %v1332 = vld [vmem:[%s5 + $0x30] sm:$0xff]
    %v1333 = vld [vmem:[%s5 + $0x38] sm:$0xff]
    %v1334 = vld [vmem:[%s5 + $0x40] sm:$0xff]
    %v1335 = vld [vmem:[%s5 + $0x48] sm:$0xff]
    %v1336 = vld [vmem:[%s5 + $0x50] sm:$0xff]
    %v1337 = vld [vmem:[%s5 + $0x58] sm:$0xff]
    %v1338 = vld [vmem:[%s5 + $0x60] sm:$0xff]
    %v1339 = vld [vmem:[%s5 + $0x68] sm:$0xff]
    %v1340 = vld [vmem:[%s5 + $0x70] sm:$0xff]
    %v1341 = vld [vmem:[%s5 + $0x78] sm:$0xff]
    %v1342 = vld [vmem:[%s7 + $0x6] sm:$0x1]
    %v1344 = vlaneseq
    %v1345 = vshrl.u32 %v1344, 7
    %v1346 = vsub.s32 0, %v1345
    %v1347 = vrot.slane %v1342, %v1346
    %1349 = vmatprep.subr.mxu0 0.0
    %1350 = vmatpush1.msra.mxu0 %v1326
    %1351 = vmatprep.subr.mxu0 0.0
    %1352 = vmatpush1.msra.mxu0 %v1327
    %1353 = vmatprep.subr.mxu0 0.0
    %1354 = vmatpush1.msra.mxu0 %v1328
    %1355 = vmatprep.subr.mxu0 0.0
    %1356 = vmatpush1.msra.mxu0 %v1329
    %1357 = vmatprep.subr.mxu0 0.0
    %1358 = vmatpush1.msra.mxu0 %v1330
    %1359 = vmatprep.subr.mxu0 0.0
    %1360 = vmatpush1.msra.mxu0 %v1331
    %1361 = vmatprep.subr.mxu0 0.0
    %1362 = vmatpush1.msra.mxu0 %v1332
    %1363 = vmatprep.subr.mxu0 0.0
    %1364 = vmatpush1.msra.mxu0 %v1333
    %1365 = vmatprep.subr.mxu0 0.0
    %1366 = vmatpush1.msra.mxu0 %v1334
    %1367 = vmatprep.subr.mxu0 0.0
    %1368 = vmatpush1.msra.mxu0 %v1335
    %1369 = vmatprep.subr.mxu0 0.0
    %1370 = vmatpush1.msra.mxu0 %v1336
    %1371 = vmatprep.subr.mxu0 0.0
    %1372 = vmatpush1.msra.mxu0 %v1337
    %1373 = vmatprep.subr.mxu0 0.0
    %1374 = vmatpush1.msra.mxu0 %v1338
    %1375 = vmatprep.subr.mxu0 0.0
    %1376 = vmatpush1.msra.mxu0 %v1339
    %1377 = vmatprep.subr.mxu0 0.0
    %1378 = vmatpush1.msra.mxu0 %v1340
    %1379 = vmatprep.subr.mxu0 0.0
    %1380 = vmatpush1.msra.mxu0 %v1341
    %1381 = vmatprep.subr.mxu0 0.0
    %1382 = vmatpush1.msra.mxu0 0.0
    %1383 = vmatprep.subr.mxu0 0.0
    %1384 = vmatpush1.msra.mxu0 0.0
    %1385 = vmatprep.subr.mxu0 0.0
    %1386 = vmatpush1.msra.mxu0 0.0
    %1387 = vmatprep.subr.mxu0 0.0
    %1388 = vmatpush1.msra.mxu0 0.0
    %1389 = vmatprep.subr.mxu0 0.0
    %1390 = vmatpush1.msra.mxu0 0.0
    %1391 = vmatprep.subr.mxu0 0.0
    %1392 = vmatpush1.msra.mxu0 0.0
    %1393 = vmatprep.subr.mxu0 0.0
    %1394 = vmatpush1.msra.mxu0 0.0
    %1395 = vmatprep.subr.mxu0 0.0
    %1396 = vmatpush1.msra.mxu0 0.0
    %1397 = vmatprep.subr.mxu0 0.0
    %1398 = vmatpush1.msra.mxu0 0.0
    %1399 = vmatprep.subr.mxu0 0.0
    %1400 = vmatpush1.msra.mxu0 0.0
    %1401 = vmatprep.subr.mxu0 0.0
    %1402 = vmatpush1.msra.mxu0 0.0
    %1403 = vmatprep.subr.mxu0 0.0
    %1404 = vmatpush1.msra.mxu0 0.0
    %1405 = vmatprep.subr.mxu0 0.0
    %1406 = vmatpush1.msra.mxu0 0.0
    %1407 = vmatprep.subr.mxu0 0.0
    %1408 = vmatpush1.msra.mxu0 0.0
    %1409 = vmatprep.subr.mxu0 0.0
    %1410 = vmatpush1.msra.mxu0 0.0
    %1411 = vmatprep.subr.mxu0 0.0
    %1412 = vmatpush1.msra.mxu0 0.0
    %1413 = vmatprep.mubr.f32.mxu0 0.0
    %1414 = vmatmul.mubr.f32.gmra.mrb[0].mxu0 %v1294
    %v1415 = vpop.f32.mrb[0].mxu0
    %v1416 = vadd.f32 %v1347, %v1415
    %v1417 = vpop.f32.mrb[0].mxu0
    %1418 = vmatprep.mubr.f32.mxu0 0.0
    %1419 = vmatmul.mubr.f32.gmra.mrb[0].mxu0 %v1295
    %v1420 = vpop.f32.mrb[0].mxu0
    %v1421 = vadd.f32 %v1347, %v1420
    %v1422 = vpop.f32.mrb[0].mxu0
    %1423 = vmatprep.mubr.f32.mxu0 0.0
    %1424 = vmatmul.mubr.f32.gmra.mrb[0].mxu0 %v1296
    %v1425 = vpop.f32.mrb[0].mxu0
    %v1426 = vadd.f32 %v1347, %v1425
    %v1427 = vpop.f32.mrb[0].mxu0
    %1428 = vmatprep.mubr.f32.mxu0 0.0
    %1429 = vmatmul.mubr.f32.gmra.mrb[0].mxu0 %v1297
    %v1430 = vpop.f32.mrb[0].mxu0
    %v1431 = vadd.f32 %v1347, %v1430
    %v1432 = vpop.f32.mrb[0].mxu0
    %1433 = vmatprep.mubr.f32.mxu0 0.0
    %1434 = vmatmul.mubr.f32.gmra.mrb[0].mxu0 %v1298
    %v1435 = vpop.f32.mrb[0].mxu0
    %v1436 = vadd.f32 %v1347, %v1435
    %v1437 = vpop.f32.mrb[0].mxu0
    %1438 = vmatprep.mubr.f32.mxu0 0.0
    %1439 = vmatmul.mubr.f32.gmra.mrb[0].mxu0 %v1299
    %v1440 = vpop.f32.mrb[0].mxu0
    %v1441 = vadd.f32 %v1347, %v1440
    %v1442 = vpop.f32.mrb[0].mxu0
    %1443 = vmatprep.mubr.f32.mxu0 0.0
    %1444 = vmatmul.mubr.f32.gmra.mrb[0].mxu0 %v1300
    %v1445 = vpop.f32.mrb[0].mxu0
    %v1446 = vadd.f32 %v1347, %v1445
    %v1447 = vpop.f32.mrb[0].mxu0
    %1448 = vmatprep.mubr.f32.mxu0 0.0
    %1449 = vmatmul.mubr.f32.gmra.mrb[0].mxu0 %v1301
    %v1450 = vpop.f32.mrb[0].mxu0
    %v1451 = vadd.f32 %v1347, %v1450
    %v1452 = vpop.f32.mrb[0].mxu0
    %1453 = vmatprep.mubr.f32.mxu0 0.0
    %1454 = vmatmul.mubr.f32.gmra.mrb[0].mxu0 %v1302
    %v1455 = vpop.f32.mrb[0].mxu0
    %v1456 = vadd.f32 %v1347, %v1455
    %v1457 = vpop.f32.mrb[0].mxu0
    %1458 = vmatprep.mubr.f32.mxu0 0.0
    %1459 = vmatmul.mubr.f32.gmra.mrb[0].mxu0 %v1303
    %v1460 = vpop.f32.mrb[0].mxu0
    %v1461 = vadd.f32 %v1347, %v1460
    %v1462 = vpop.f32.mrb[0].mxu0
    %1463 = vmatprep.mubr.f32.mxu0 0.0
    %1464 = vmatmul.mubr.f32.gmra.mrb[0].mxu0 %v1304
    %v1465 = vpop.f32.mrb[0].mxu0
    %v1466 = vadd.f32 %v1347, %v1465
    %v1467 = vpop.f32.mrb[0].mxu0
    %1468 = vmatprep.mubr.f32.mxu0 0.0
    %1469 = vmatmul.mubr.f32.gmra.mrb[0].mxu0 %v1305
    %v1470 = vpop.f32.mrb[0].mxu0
    %v1471 = vadd.f32 %v1347, %v1470
    %v1472 = vpop.f32.mrb[0].mxu0
    %1473 = vmatprep.mubr.f32.mxu0 0.0
    %1474 = vmatmul.mubr.f32.gmra.mrb[0].mxu0 %v1306
    %v1475 = vpop.f32.mrb[0].mxu0
    %v1476 = vadd.f32 %v1347, %v1475
    %v1477 = vpop.f32.mrb[0].mxu0
    %1478 = vmatprep.mubr.f32.mxu0 0.0
    %1479 = vmatmul.mubr.f32.gmra.mrb[0].mxu0 %v1307
    %v1480 = vpop.f32.mrb[0].mxu0
    %v1481 = vadd.f32 %v1347, %v1480
    %v1482 = vpop.f32.mrb[0].mxu0
    %1483 = vmatprep.mubr.f32.mxu0 0.0
    %1484 = vmatmul.mubr.f32.gmra.mrb[0].mxu0 %v1308
    %v1485 = vpop.f32.mrb[0].mxu0
    %v1486 = vadd.f32 %v1347, %v1485
    %v1487 = vpop.f32.mrb[0].mxu0
    %1488 = vmatprep.mubr.f32.mxu0 0.0
    %1489 = vmatmul.mubr.f32.gmra.mrb[0].mxu0 %v1309
    %v1490 = vpop.f32.mrb[0].mxu0
    %v1491 = vadd.f32 %v1347, %v1490
    %v1492 = vpop.f32.mrb[0].mxu0
    %1493 = vmatprep.mubr.f32.mxu0 0.0
    %1494 = vmatmul.mubr.f32.gmra.mrb[0].mxu0 %v1310
    %v1495 = vpop.f32.mrb[0].mxu0
    %v1496 = vadd.f32 %v1347, %v1495
    %v1497 = vpop.f32.mrb[0].mxu0
    %1498 = vmatprep.mubr.f32.mxu0 0.0
    %1499 = vmatmul.mubr.f32.gmra.mrb[0].mxu0 %v1311
    %v1500 = vpop.f32.mrb[0].mxu0
    %v1501 = vadd.f32 %v1347, %v1500
    %v1502 = vpop.f32.mrb[0].mxu0
    %1503 = vmatprep.mubr.f32.mxu0 0.0
    %1504 = vmatmul.mubr.f32.gmra.mrb[0].mxu0 %v1312
    %v1505 = vpop.f32.mrb[0].mxu0
    %v1506 = vadd.f32 %v1347, %v1505
    %v1507 = vpop.f32.mrb[0].mxu0
    %1508 = vmatprep.mubr.f32.mxu0 0.0
    %1509 = vmatmul.mubr.f32.gmra.mrb[0].mxu0 %v1313
    %v1510 = vpop.f32.mrb[0].mxu0
    %v1511 = vadd.f32 %v1347, %v1510
    %v1512 = vpop.f32.mrb[0].mxu0
    %1513 = vmatprep.mubr.f32.mxu0 0.0
    %1514 = vmatmul.mubr.f32.gmra.mrb[0].mxu0 %v1314
    %v1515 = vpop.f32.mrb[0].mxu0
    %v1516 = vadd.f32 %v1347, %v1515
    %v1517 = vpop.f32.mrb[0].mxu0
    %1518 = vmatprep.mubr.f32.mxu0 0.0
    %1519 = vmatmul.mubr.f32.gmra.mrb[0].mxu0 %v1315
    %v1520 = vpop.f32.mrb[0].mxu0
    %v1521 = vadd.f32 %v1347, %v1520
    %v1522 = vpop.f32.mrb[0].mxu0
    %1523 = vmatprep.mubr.f32.mxu0 0.0
    %1524 = vmatmul.mubr.f32.gmra.mrb[0].mxu0 %v1316
    %v1525 = vpop.f32.mrb[0].mxu0
    %v1526 = vadd.f32 %v1347, %v1525
    %v1527 = vpop.f32.mrb[0].mxu0
    %1528 = vmatprep.mubr.f32.mxu0 0.0
    %1529 = vmatmul.mubr.f32.gmra.mrb[0].mxu0 %v1317
    %v1530 = vpop.f32.mrb[0].mxu0
    %v1531 = vadd.f32 %v1347, %v1530
    %v1532 = vpop.f32.mrb[0].mxu0
    %1533 = vmatprep.mubr.f32.mxu0 0.0
    %1534 = vmatmul.mubr.f32.gmra.mrb[0].mxu0 %v1318
    %v1535 = vpop.f32.mrb[0].mxu0
    %v1536 = vadd.f32 %v1347, %v1535
    %v1537 = vpop.f32.mrb[0].mxu0
    %1538 = vmatprep.mubr.f32.mxu0 0.0
    %1539 = vmatmul.mubr.f32.gmra.mrb[0].mxu0 %v1319
    %v1540 = vpop.f32.mrb[0].mxu0
    %v1541 = vadd.f32 %v1347, %v1540
    %v1542 = vpop.f32.mrb[0].mxu0
    %1543 = vmatprep.mubr.f32.mxu0 0.0
    %1544 = vmatmul.mubr.f32.gmra.mrb[0].mxu0 %v1320
    %v1545 = vpop.f32.mrb[0].mxu0
    %v1546 = vadd.f32 %v1347, %v1545
    %v1547 = vpop.f32.mrb[0].mxu0
    %1548 = vmatprep.mubr.f32.mxu0 0.0
    %1549 = vmatmul.mubr.f32.gmra.mrb[0].mxu0 %v1321
    %v1550 = vpop.f32.mrb[0].mxu0
    %v1551 = vadd.f32 %v1347, %v1550
    %v1552 = vpop.f32.mrb[0].mxu0
    %1553 = vmatprep.mubr.f32.mxu0 0.0
    %1554 = vmatmul.mubr.f32.gmra.mrb[0].mxu0 %v1322
    %v1555 = vpop.f32.mrb[0].mxu0
    %v1556 = vadd.f32 %v1347, %v1555
    %v1557 = vpop.f32.mrb[0].mxu0
    %1558 = vmatprep.mubr.f32.mxu0 0.0
    %1559 = vmatmul.mubr.f32.gmra.mrb[0].mxu0 %v1323
    %v1560 = vpop.f32.mrb[0].mxu0
    %v1561 = vadd.f32 %v1347, %v1560
    %v1562 = vpop.f32.mrb[0].mxu0
    %1563 = vmatprep.mubr.f32.mxu0 0.0
    %1564 = vmatmul.mubr.f32.gmra.mrb[0].mxu0 %v1324
    %v1565 = vpop.f32.mrb[0].mxu0
    %v1566 = vadd.f32 %v1347, %v1565
    %v1567 = vpop.f32.mrb[0].mxu0
    %1568 = vmatprep.mubr.f32.mxu0 0.0
    %1569 = vmatmul.mubr.f32.gmra.mrb[0].mxu0 %v1325
    %v1570 = vpop.f32.mrb[0].mxu0
    %v1571 = vadd.f32 %v1347, %v1570
    %v1572 = vpop.f32.mrb[0].mxu0
    %1573 = vdwg.mxu0
    %v1574 = vtanh.pop %v1416
    %v1575 = vtanh.pop %v1421
    %v1576 = vtanh.pop %v1426
    %v1577 = vtanh.pop %v1431
    %v1578 = vtanh.pop %v1436
    %v1579 = vtanh.pop %v1441
    %v1580 = vtanh.pop %v1446
    %v1581 = vtanh.pop %v1451
    %v1582 = vtanh.pop %v1456
    %v1583 = vtanh.pop %v1461
    %v1584 = vtanh.pop %v1466
    %v1585 = vtanh.pop %v1471
    %v1586 = vtanh.pop %v1476
    %v1587 = vtanh.pop %v1481
    %v1588 = vtanh.pop %v1486
    %v1589 = vtanh.pop %v1491
    %v1590 = vtanh.pop %v1496
    %v1591 = vtanh.pop %v1501
    %v1592 = vtanh.pop %v1506
    %v1593 = vtanh.pop %v1511
    %v1594 = vtanh.pop %v1516
    %v1595 = vtanh.pop %v1521
    %v1596 = vtanh.pop %v1526
    %v1597 = vtanh.pop %v1531
    %v1598 = vtanh.pop %v1536
    %v1599 = vtanh.pop %v1541
    %v1600 = vtanh.pop %v1546
    %v1601 = vtanh.pop %v1551
    %v1602 = vtanh.pop %v1556
    %v1603 = vtanh.pop %v1561
    %v1604 = vtanh.pop %v1566
    %v1605 = vtanh.pop %v1571
    %v1606 = vld [vmem:[%s6] sm:$0xff]
    %v1607 = vld [vmem:[%s6 + $0x8] sm:$0xff]
    %v1608 = vld [vmem:[%s6 + $0x10] sm:$0xff]
    %v1609 = vld [vmem:[%s6 + $0x18] sm:$0xff]
    %v1610 = vld [vmem:[%s7 + $0x8] sm:$0x1]
    %v1612 = vlaneseq
    %v1613 = vshrl.u32 %v1612, 7
    %v1614 = vsub.s32 0, %v1613
    %v1615 = vrot.slane %v1610, %v1614
    %v1618 = vsel %vm442, %v1574, 0
    %v1621 = vsel %vm442, %v1575, 0
    %v1624 = vsel %vm442, %v1576, 0
    %v1627 = vsel %vm442, %v1577, 0
    %v1630 = vsel %vm442, %v1578, 0
    %v1633 = vsel %vm442, %v1579, 0
    %v1636 = vsel %vm442, %v1580, 0
    %v1639 = vsel %vm442, %v1581, 0
    %v1642 = vsel %vm442, %v1582, 0
    %v1645 = vsel %vm442, %v1583, 0
    %v1648 = vsel %vm442, %v1584, 0
    %v1651 = vsel %vm442, %v1585, 0
    %v1654 = vsel %vm442, %v1586, 0
    %v1657 = vsel %vm442, %v1587, 0
    %v1660 = vsel %vm442, %v1588, 0
    %v1663 = vsel %vm442, %v1589, 0
    %v1666 = vsel %vm442, %v1590, 0
    %v1669 = vsel %vm442, %v1591, 0
    %v1672 = vsel %vm442, %v1592, 0
    %v1675 = vsel %vm442, %v1593, 0
    %v1678 = vsel %vm442, %v1594, 0
    %v1681 = vsel %vm442, %v1595, 0
    %v1684 = vsel %vm442, %v1596, 0
    %v1687 = vsel %vm442, %v1597, 0
    %v1690 = vsel %vm442, %v1598, 0
    %v1693 = vsel %vm442, %v1599, 0
    %v1696 = vsel %vm442, %v1600, 0
    %v1699 = vsel %vm442, %v1601, 0
    %v1702 = vsel %vm442, %v1602, 0
    %v1705 = vsel %vm442, %v1603, 0
    %v1708 = vsel %vm442, %v1604, 0
    %v1711 = vsel %vm442, %v1605, 0
    %1713 = vmatprep.subr.mxu0 0.0
    %1714 = vmatpush1.msra.mxu0 %v1606
    %1715 = vmatprep.subr.mxu0 0.0
    %1716 = vmatpush1.msra.mxu0 %v1607
    %1717 = vmatprep.subr.mxu0 0.0
    %1718 = vmatpush1.msra.mxu0 %v1608
    %1719 = vmatprep.subr.mxu0 0.0
    %1720 = vmatpush1.msra.mxu0 %v1609
    %1721 = vmatprep.subr.mxu0 0.0
    %1722 = vmatpush1.msra.mxu0 0.0
    %1723 = vmatprep.subr.mxu0 0.0
    %1724 = vmatpush1.msra.mxu0 0.0
    %1725 = vmatprep.subr.mxu0 0.0
    %1726 = vmatpush1.msra.mxu0 0.0
    %1727 = vmatprep.subr.mxu0 0.0
    %1728 = vmatpush1.msra.mxu0 0.0
    %1729 = vmatprep.subr.mxu0 0.0
    %1730 = vmatpush1.msra.mxu0 0.0
    %1731 = vmatprep.subr.mxu0 0.0
    %1732 = vmatpush1.msra.mxu0 0.0
    %1733 = vmatprep.subr.mxu0 0.0
    %1734 = vmatpush1.msra.mxu0 0.0
    %1735 = vmatprep.subr.mxu0 0.0
    %1736 = vmatpush1.msra.mxu0 0.0
    %1737 = vmatprep.subr.mxu0 0.0
    %1738 = vmatpush1.msra.mxu0 0.0
    %1739 = vmatprep.subr.mxu0 0.0
    %1740 = vmatpush1.msra.mxu0 0.0
    %1741 = vmatprep.subr.mxu0 0.0
    %1742 = vmatpush1.msra.mxu0 0.0
    %1743 = vmatprep.subr.mxu0 0.0
    %1744 = vmatpush1.msra.mxu0 0.0
    %1745 = vmatprep.subr.mxu0 0.0
    %1746 = vmatpush1.msra.mxu0 0.0
    %1747 = vmatprep.subr.mxu0 0.0
    %1748 = vmatpush1.msra.mxu0 0.0
    %1749 = vmatprep.subr.mxu0 0.0
    %1750 = vmatpush1.msra.mxu0 0.0
    %1751 = vmatprep.subr.mxu0 0.0
    %1752 = vmatpush1.msra.mxu0 0.0
    %1753 = vmatprep.subr.mxu0 0.0
    %1754 = vmatpush1.msra.mxu0 0.0
    %1755 = vmatprep.subr.mxu0 0.0
    %1756 = vmatpush1.msra.mxu0 0.0
    %1757 = vmatprep.subr.mxu0 0.0
    %1758 = vmatpush1.msra.mxu0 0.0
    %1759 = vmatprep.subr.mxu0 0.0
    %1760 = vmatpush1.msra.mxu0 0.0
    %1761 = vmatprep.subr.mxu0 0.0
    %1762 = vmatpush1.msra.mxu0 0.0
    %1763 = vmatprep.subr.mxu0 0.0
    %1764 = vmatpush1.msra.mxu0 0.0
    %1765 = vmatprep.subr.mxu0 0.0
    %1766 = vmatpush1.msra.mxu0 0.0
    %1767 = vmatprep.subr.mxu0 0.0
    %1768 = vmatpush1.msra.mxu0 0.0
    %1769 = vmatprep.subr.mxu0 0.0
    %1770 = vmatpush1.msra.mxu0 0.0
    %1771 = vmatprep.subr.mxu0 0.0
    %1772 = vmatpush1.msra.mxu0 0.0
    %1773 = vmatprep.subr.mxu0 0.0
    %1774 = vmatpush1.msra.mxu0 0.0
    %1775 = vmatprep.subr.mxu0 0.0
    %1776 = vmatpush1.msra.mxu0 0.0
    %1777 = vmatprep.mubr.f32.mxu0 0.0
    %1778 = vmatmul.mubr.f32.gmra.mrb[0].mxu0 %v1618
    %v1779 = vpop.f32.mrb[0].mxu0
    %v1780 = vadd.f32 %v1615, %v1779
    %v1781 = vpop.f32.mrb[0].mxu0
    %1782 = vmatprep.mubr.f32.mxu0 0.0
    %1783 = vmatmul.mubr.f32.gmra.mrb[0].mxu0 %v1621
    %v1784 = vpop.f32.mrb[0].mxu0
    %v1785 = vadd.f32 %v1615, %v1784
    %v1786 = vpop.f32.mrb[0].mxu0
    %1787 = vmatprep.mubr.f32.mxu0 0.0
    %1788 = vmatmul.mubr.f32.gmra.mrb[0].mxu0 %v1624
    %v1789 = vpop.f32.mrb[0].mxu0
    %v1790 = vadd.f32 %v1615, %v1789
    %v1791 = vpop.f32.mrb[0].mxu0
    %1792 = vmatprep.mubr.f32.mxu0 0.0
    %1793 = vmatmul.mubr.f32.gmra.mrb[0].mxu0 %v1627
    %v1794 = vpop.f32.mrb[0].mxu0
    %v1795 = vadd.f32 %v1615, %v1794
    %v1796 = vpop.f32.mrb[0].mxu0
    %1797 = vmatprep.mubr.f32.mxu0 0.0
    %1798 = vmatmul.mubr.f32.gmra.mrb[0].mxu0 %v1630
    %v1799 = vpop.f32.mrb[0].mxu0
    %v1800 = vadd.f32 %v1615, %v1799
    %v1801 = vpop.f32.mrb[0].mxu0
    %1802 = vmatprep.mubr.f32.mxu0 0.0
    %1803 = vmatmul.mubr.f32.gmra.mrb[0].mxu0 %v1633
    %v1804 = vpop.f32.mrb[0].mxu0
    %v1805 = vadd.f32 %v1615, %v1804
    %v1806 = vpop.f32.mrb[0].mxu0
    %1807 = vmatprep.mubr.f32.mxu0 0.0
    %1808 = vmatmul.mubr.f32.gmra.mrb[0].mxu0 %v1636
    %v1809 = vpop.f32.mrb[0].mxu0
    %v1810 = vadd.f32 %v1615, %v1809
    %v1811 = vpop.f32.mrb[0].mxu0
    %1812 = vmatprep.mubr.f32.mxu0 0.0
    %1813 = vmatmul.mubr.f32.gmra.mrb[0].mxu0 %v1639
    %v1814 = vpop.f32.mrb[0].mxu0
    %v1815 = vadd.f32 %v1615, %v1814
    %v1816 = vpop.f32.mrb[0].mxu0
    %1817 = vmatprep.mubr.f32.mxu0 0.0
    %1818 = vmatmul.mubr.f32.gmra.mrb[0].mxu0 %v1642
    %v1819 = vpop.f32.mrb[0].mxu0
    %v1820 = vadd.f32 %v1615, %v1819
    %v1821 = vpop.f32.mrb[0].mxu0
    %1822 = vmatprep.mubr.f32.mxu0 0.0
    %1823 = vmatmul.mubr.f32.gmra.mrb[0].mxu0 %v1645
    %v1824 = vpop.f32.mrb[0].mxu0
    %v1825 = vadd.f32 %v1615, %v1824
    %v1826 = vpop.f32.mrb[0].mxu0
    %1827 = vmatprep.mubr.f32.mxu0 0.0
    %1828 = vmatmul.mubr.f32.gmra.mrb[0].mxu0 %v1648
    %v1829 = vpop.f32.mrb[0].mxu0
    %v1830 = vadd.f32 %v1615, %v1829
    %v1831 = vpop.f32.mrb[0].mxu0
    %1832 = vmatprep.mubr.f32.mxu0 0.0
    %1833 = vmatmul.mubr.f32.gmra.mrb[0].mxu0 %v1651
    %v1834 = vpop.f32.mrb[0].mxu0
    %v1835 = vadd.f32 %v1615, %v1834
    %v1836 = vpop.f32.mrb[0].mxu0
    %1837 = vmatprep.mubr.f32.mxu0 0.0
    %1838 = vmatmul.mubr.f32.gmra.mrb[0].mxu0 %v1654
    %v1839 = vpop.f32.mrb[0].mxu0
    %v1840 = vadd.f32 %v1615, %v1839
    %v1841 = vpop.f32.mrb[0].mxu0
    %1842 = vmatprep.mubr.f32.mxu0 0.0
    %1843 = vmatmul.mubr.f32.gmra.mrb[0].mxu0 %v1657
    %v1844 = vpop.f32.mrb[0].mxu0
    %v1845 = vadd.f32 %v1615, %v1844
    %v1846 = vpop.f32.mrb[0].mxu0
    %1847 = vmatprep.mubr.f32.mxu0 0.0
    %1848 = vmatmul.mubr.f32.gmra.mrb[0].mxu0 %v1660
    %v1849 = vpop.f32.mrb[0].mxu0
    %v1850 = vadd.f32 %v1615, %v1849
    %v1851 = vpop.f32.mrb[0].mxu0
    %1852 = vmatprep.mubr.f32.mxu0 0.0
    %1853 = vmatmul.mubr.f32.gmra.mrb[0].mxu0 %v1663
    %v1854 = vpop.f32.mrb[0].mxu0
    %v1855 = vadd.f32 %v1615, %v1854
    %v1856 = vpop.f32.mrb[0].mxu0
    %1857 = vmatprep.mubr.f32.mxu0 0.0
    %1858 = vmatmul.mubr.f32.gmra.mrb[0].mxu0 %v1666
    %v1859 = vpop.f32.mrb[0].mxu0
    %v1860 = vadd.f32 %v1615, %v1859
    %v1861 = vpop.f32.mrb[0].mxu0
    %1862 = vmatprep.mubr.f32.mxu0 0.0
    %1863 = vmatmul.mubr.f32.gmra.mrb[0].mxu0 %v1669
    %v1864 = vpop.f32.mrb[0].mxu0
    %v1865 = vadd.f32 %v1615, %v1864
    %v1866 = vpop.f32.mrb[0].mxu0
    %1867 = vmatprep.mubr.f32.mxu0 0.0
    %1868 = vmatmul.mubr.f32.gmra.mrb[0].mxu0 %v1672
    %v1869 = vpop.f32.mrb[0].mxu0
    %v1870 = vadd.f32 %v1615, %v1869
    %v1871 = vpop.f32.mrb[0].mxu0
    %1872 = vmatprep.mubr.f32.mxu0 0.0
    %1873 = vmatmul.mubr.f32.gmra.mrb[0].mxu0 %v1675
    %v1874 = vpop.f32.mrb[0].mxu0
    %v1875 = vadd.f32 %v1615, %v1874
    %v1876 = vpop.f32.mrb[0].mxu0
    %1877 = vmatprep.mubr.f32.mxu0 0.0
    %1878 = vmatmul.mubr.f32.gmra.mrb[0].mxu0 %v1678
    %v1879 = vpop.f32.mrb[0].mxu0
    %v1880 = vadd.f32 %v1615, %v1879
    %v1881 = vpop.f32.mrb[0].mxu0
    %1882 = vmatprep.mubr.f32.mxu0 0.0
    %1883 = vmatmul.mubr.f32.gmra.mrb[0].mxu0 %v1681
    %v1884 = vpop.f32.mrb[0].mxu0
    %v1885 = vadd.f32 %v1615, %v1884
    %v1886 = vpop.f32.mrb[0].mxu0
    %1887 = vmatprep.mubr.f32.mxu0 0.0
    %1888 = vmatmul.mubr.f32.gmra.mrb[0].mxu0 %v1684
    %v1889 = vpop.f32.mrb[0].mxu0
    %v1890 = vadd.f32 %v1615, %v1889
    %v1891 = vpop.f32.mrb[0].mxu0
    %1892 = vmatprep.mubr.f32.mxu0 0.0
    %1893 = vmatmul.mubr.f32.gmra.mrb[0].mxu0 %v1687
    %v1894 = vpop.f32.mrb[0].mxu0
    %v1895 = vadd.f32 %v1615, %v1894
    %v1896 = vpop.f32.mrb[0].mxu0
    %1897 = vmatprep.mubr.f32.mxu0 0.0
    %1898 = vmatmul.mubr.f32.gmra.mrb[0].mxu0 %v1690
    %v1899 = vpop.f32.mrb[0].mxu0
    %v1900 = vadd.f32 %v1615, %v1899
    %v1901 = vpop.f32.mrb[0].mxu0
    %1902 = vmatprep.mubr.f32.mxu0 0.0
    %1903 = vmatmul.mubr.f32.gmra.mrb[0].mxu0 %v1693
    %v1904 = vpop.f32.mrb[0].mxu0
    %v1905 = vadd.f32 %v1615, %v1904
    %v1906 = vpop.f32.mrb[0].mxu0
    %1907 = vmatprep.mubr.f32.mxu0 0.0
    %1908 = vmatmul.mubr.f32.gmra.mrb[0].mxu0 %v1696
    %v1909 = vpop.f32.mrb[0].mxu0
    %v1910 = vadd.f32 %v1615, %v1909
    %v1911 = vpop.f32.mrb[0].mxu0
    %1912 = vmatprep.mubr.f32.mxu0 0.0
    %1913 = vmatmul.mubr.f32.gmra.mrb[0].mxu0 %v1699
    %v1914 = vpop.f32.mrb[0].mxu0
    %v1915 = vadd.f32 %v1615, %v1914
    %v1916 = vpop.f32.mrb[0].mxu0
    %1917 = vmatprep.mubr.f32.mxu0 0.0
    %1918 = vmatmul.mubr.f32.gmra.mrb[0].mxu0 %v1702
    %v1919 = vpop.f32.mrb[0].mxu0
    %v1920 = vadd.f32 %v1615, %v1919
    %v1921 = vpop.f32.mrb[0].mxu0
    %1922 = vmatprep.mubr.f32.mxu0 0.0
    %1923 = vmatmul.mubr.f32.gmra.mrb[0].mxu0 %v1705
    %v1924 = vpop.f32.mrb[0].mxu0
    %v1925 = vadd.f32 %v1615, %v1924
    %v1926 = vpop.f32.mrb[0].mxu0
    %1927 = vmatprep.mubr.f32.mxu0 0.0
    %1928 = vmatmul.mubr.f32.gmra.mrb[0].mxu0 %v1708
    %v1929 = vpop.f32.mrb[0].mxu0
    %v1930 = vadd.f32 %v1615, %v1929
    %v1931 = vpop.f32.mrb[0].mxu0
    %1932 = vmatprep.mubr.f32.mxu0 0.0
    %1933 = vmatmul.mubr.f32.gmra.mrb[0].mxu0 %v1711
    %v1934 = vpop.f32.mrb[0].mxu0
    %v1935 = vadd.f32 %v1615, %v1934
    %v1936 = vpop.f32.mrb[0].mxu0
    %1937 = vdwg.mxu0
    %1938 = vst [vmem:[#allocation2] sm:$0xff] %v976
    %1939 = vst [vmem:[#allocation2 + $0x8] sm:$0xff] %v1167
    %1940 = vst [vmem:[#allocation2 + $0x10] sm:$0xff] %v1294
    %1941 = vst [vmem:[#allocation2 + $0x18] sm:$0xff] %v1780
    %1942 = vst [vmem:[#allocation2 + $0x20] sm:$0xff] %v982
    %1943 = vst [vmem:[#allocation2 + $0x28] sm:$0xff] %v1169
    %1944 = vst [vmem:[#allocation2 + $0x30] sm:$0xff] %v1295
    %1945 = vst [vmem:[#allocation2 + $0x38] sm:$0xff] %v1785
    %1946 = vst [vmem:[#allocation2 + $0x40] sm:$0xff] %v988
    %1947 = vst [vmem:[#allocation2 + $0x48] sm:$0xff] %v1171
    %1948 = vst [vmem:[#allocation2 + $0x50] sm:$0xff] %v1296
    %1949 = vst [vmem:[#allocation2 + $0x58] sm:$0xff] %v1790
    %1950 = vst [vmem:[#allocation2 + $0x60] sm:$0xff] %v994
    %1951 = vst [vmem:[#allocation2 + $0x68] sm:$0xff] %v1173
    %1952 = vst [vmem:[#allocation2 + $0x70] sm:$0xff] %v1297
    %1953 = vst [vmem:[#allocation2 + $0x78] sm:$0xff] %v1795
    %1954 = vst [vmem:[#allocation2 + $0x80] sm:$0xff] %v1000
    %1955 = vst [vmem:[#allocation2 + $0x88] sm:$0xff] %v1175
    %1956 = vst [vmem:[#allocation2 + $0x90] sm:$0xff] %v1298
    %1957 = vst [vmem:[#allocation2 + $0x98] sm:$0xff] %v1800
    %1958 = vst [vmem:[#allocation2 + $0xa0] sm:$0xff] %v1006
    %1959 = vst [vmem:[#allocation2 + $0xa8] sm:$0xff] %v1177
    %1960 = vst [vmem:[#allocation2 + $0xb0] sm:$0xff] %v1299
    %1961 = vst [vmem:[#allocation2 + $0xb8] sm:$0xff] %v1805
    %1962 = vst [vmem:[#allocation2 + $0xc0] sm:$0xff] %v1012
    %1963 = vst [vmem:[#allocation2 + $0xc8] sm:$0xff] %v1179
    %1964 = vst [vmem:[#allocation2 + $0xd0] sm:$0xff] %v1300
    %1965 = vst [vmem:[#allocation2 + $0xd8] sm:$0xff] %v1810
    %1966 = vst [vmem:[#allocation2 + $0xe0] sm:$0xff] %v1018
    %1967 = vst [vmem:[#allocation2 + $0xe8] sm:$0xff] %v1181
    %1968 = vst [vmem:[#allocation2 + $0xf0] sm:$0xff] %v1301
    %1969 = vst [vmem:[#allocation2 + $0xf8] sm:$0xff] %v1815
    %1970 = vst [vmem:[#allocation2 + $0x100] sm:$0xff] %v1024
    %1971 = vst [vmem:[#allocation2 + $0x108] sm:$0xff] %v1183
    %1972 = vst [vmem:[#allocation2 + $0x110] sm:$0xff] %v1302
    %1973 = vst [vmem:[#allocation2 + $0x118] sm:$0xff] %v1820
    %1974 = vst [vmem:[#allocation2 + $0x120] sm:$0xff] %v1030
    %1975 = vst [vmem:[#allocation2 + $0x128] sm:$0xff] %v1185
    %1976 = vst [vmem:[#allocation2 + $0x130] sm:$0xff] %v1303
    %1977 = vst [vmem:[#allocation2 + $0x138] sm:$0xff] %v1825
    %1978 = vst [vmem:[#allocation2 + $0x140] sm:$0xff] %v1036
    %1979 = vst [vmem:[#allocation2 + $0x148] sm:$0xff] %v1187
    %1980 = vst [vmem:[#allocation2 + $0x150] sm:$0xff] %v1304
    %1981 = vst [vmem:[#allocation2 + $0x158] sm:$0xff] %v1830
    %1982 = vst [vmem:[#allocation2 + $0x160] sm:$0xff] %v1042
    %1983 = vst [vmem:[#allocation2 + $0x168] sm:$0xff] %v1189
    %1984 = vst [vmem:[#allocation2 + $0x170] sm:$0xff] %v1305
    %1985 = vst [vmem:[#allocation2 + $0x178] sm:$0xff] %v1835
    %1986 = vst [vmem:[#allocation2 + $0x180] sm:$0xff] %v1048
    %1987 = vst [vmem:[#allocation2 + $0x188] sm:$0xff] %v1191
    %1988 = vst [vmem:[#allocation2 + $0x190] sm:$0xff] %v1306
    %1989 = vst [vmem:[#allocation2 + $0x198] sm:$0xff] %v1840
    %1990 = vst [vmem:[#allocation2 + $0x1a0] sm:$0xff] %v1054
    %1991 = vst [vmem:[#allocation2 + $0x1a8] sm:$0xff] %v1193
    %1992 = vst [vmem:[#allocation2 + $0x1b0] sm:$0xff] %v1307
    %1993 = vst [vmem:[#allocation2 + $0x1b8] sm:$0xff] %v1845
    %1994 = vst [vmem:[#allocation2 + $0x1c0] sm:$0xff] %v1060
    %1995 = vst [vmem:[#allocation2 + $0x1c8] sm:$0xff] %v1195
    %1996 = vst [vmem:[#allocation2 + $0x1d0] sm:$0xff] %v1308
    %1997 = vst [vmem:[#allocation2 + $0x1d8] sm:$0xff] %v1850
    %1998 = vst [vmem:[#allocation2 + $0x1e0] sm:$0xff] %v1066
    %1999 = vst [vmem:[#allocation2 + $0x1e8] sm:$0xff] %v1197
    %2000 = vst [vmem:[#allocation2 + $0x1f0] sm:$0xff] %v1309
    %2001 = vst [vmem:[#allocation2 + $0x1f8] sm:$0xff] %v1855
    %2002 = vst [vmem:[#allocation2 + $0x200] sm:$0xff] %v1072
    %2003 = vst [vmem:[#allocation2 + $0x208] sm:$0xff] %v1199
    %2004 = vst [vmem:[#allocation2 + $0x210] sm:$0xff] %v1310
    %2005 = vst [vmem:[#allocation2 + $0x218] sm:$0xff] %v1860
    %2006 = vst [vmem:[#allocation2 + $0x220] sm:$0xff] %v1078
    %2007 = vst [vmem:[#allocation2 + $0x228] sm:$0xff] %v1201
    %2008 = vst [vmem:[#allocation2 + $0x230] sm:$0xff] %v1311
    %2009 = vst [vmem:[#allocation2 + $0x238] sm:$0xff] %v1865
    %2010 = vst [vmem:[#allocation2 + $0x240] sm:$0xff] %v1084
    %2011 = vst [vmem:[#allocation2 + $0x248] sm:$0xff] %v1203
    %2012 = vst [vmem:[#allocation2 + $0x250] sm:$0xff] %v1312
    %2013 = vst [vmem:[#allocation2 + $0x258] sm:$0xff] %v1870
    %2014 = vst [vmem:[#allocation2 + $0x260] sm:$0xff] %v1090
    %2015 = vst [vmem:[#allocation2 + $0x268] sm:$0xff] %v1205
    %2016 = vst [vmem:[#allocation2 + $0x270] sm:$0xff] %v1313
    %2017 = vst [vmem:[#allocation2 + $0x278] sm:$0xff] %v1875
    %2018 = vst [vmem:[#allocation2 + $0x280] sm:$0xff] %v1096
    %2019 = vst [vmem:[#allocation2 + $0x288] sm:$0xff] %v1207
    %2020 = vst [vmem:[#allocation2 + $0x290] sm:$0xff] %v1314
    %2021 = vst [vmem:[#allocation2 + $0x298] sm:$0xff] %v1880
    %2022 = vst [vmem:[#allocation2 + $0x2a0] sm:$0xff] %v1102
    %2023 = vst [vmem:[#allocation2 + $0x2a8] sm:$0xff] %v1209
    %2024 = vst [vmem:[#allocation2 + $0x2b0] sm:$0xff] %v1315
    %2025 = vst [vmem:[#allocation2 + $0x2b8] sm:$0xff] %v1885
    %2026 = vst [vmem:[#allocation2 + $0x2c0] sm:$0xff] %v1108
    %2027 = vst [vmem:[#allocation2 + $0x2c8] sm:$0xff] %v1211
    %2028 = vst [vmem:[#allocation2 + $0x2d0] sm:$0xff] %v1316
    %2029 = vst [vmem:[#allocation2 + $0x2d8] sm:$0xff] %v1890
    %2030 = vst [vmem:[#allocation2 + $0x2e0] sm:$0xff] %v1114
    %2031 = vst [vmem:[#allocation2 + $0x2e8] sm:$0xff] %v1213
    %2032 = vst [vmem:[#allocation2 + $0x2f0] sm:$0xff] %v1317
    %2033 = vst [vmem:[#allocation2 + $0x2f8] sm:$0xff] %v1895
    %2034 = vst [vmem:[#allocation2 + $0x300] sm:$0xff] %v1120
    %2035 = vst [vmem:[#allocation2 + $0x308] sm:$0xff] %v1215
    %2036 = vst [vmem:[#allocation2 + $0x310] sm:$0xff] %v1318
    %2037 = vst [vmem:[#allocation2 + $0x318] sm:$0xff] %v1900
    %2038 = vst [vmem:[#allocation2 + $0x320] sm:$0xff] %v1126
    %2039 = vst [vmem:[#allocation2 + $0x328] sm:$0xff] %v1217
    %2040 = vst [vmem:[#allocation2 + $0x330] sm:$0xff] %v1319
    %2041 = vst [vmem:[#allocation2 + $0x338] sm:$0xff] %v1905
    %2042 = vst [vmem:[#allocation2 + $0x340] sm:$0xff] %v1132
    %2043 = vst [vmem:[#allocation2 + $0x348] sm:$0xff] %v1219
    %2044 = vst [vmem:[#allocation2 + $0x350] sm:$0xff] %v1320
    %2045 = vst [vmem:[#allocation2 + $0x358] sm:$0xff] %v1910
    %2046 = vst [vmem:[#allocation2 + $0x360] sm:$0xff] %v1138
    %2047 = vst [vmem:[#allocation2 + $0x368] sm:$0xff] %v1221
    %2048 = vst [vmem:[#allocation2 + $0x370] sm:$0xff] %v1321
    %2049 = vst [vmem:[#allocation2 + $0x378] sm:$0xff] %v1915
    %2050 = vst [vmem:[#allocation2 + $0x380] sm:$0xff] %v1144
    %2051 = vst [vmem:[#allocation2 + $0x388] sm:$0xff] %v1223
    %2052 = vst [vmem:[#allocation2 + $0x390] sm:$0xff] %v1322
    %2053 = vst [vmem:[#allocation2 + $0x398] sm:$0xff] %v1920
    %2054 = vst [vmem:[#allocation2 + $0x3a0] sm:$0xff] %v1150
    %2055 = vst [vmem:[#allocation2 + $0x3a8] sm:$0xff] %v1225
    %2056 = vst [vmem:[#allocation2 + $0x3b0] sm:$0xff] %v1323
    %2057 = vst [vmem:[#allocation2 + $0x3b8] sm:$0xff] %v1925
    %2058 = vst [vmem:[#allocation2 + $0x3c0] sm:$0xff] %v1156
    %2059 = vst [vmem:[#allocation2 + $0x3c8] sm:$0xff] %v1227
    %2060 = vst [vmem:[#allocation2 + $0x3d0] sm:$0xff] %v1324
    %2061 = vst [vmem:[#allocation2 + $0x3d8] sm:$0xff] %v1930
    %2062 = vst [vmem:[#allocation2 + $0x3e0] sm:$0xff] %v1162
    %2063 = vst [vmem:[#allocation2 + $0x3e8] sm:$0xff] %v1229
    %2064 = vst [vmem:[#allocation2 + $0x3f0] sm:$0xff] %v1325
    %2065 = vst [vmem:[#allocation2 + $0x3f8] sm:$0xff] %v1935
    // Predicated region
    $region34: #{tpu_custom_call.1} parent=1 // pred_check
      _
    $region35: #{tpu_custom_call.1} parent=1 // pred_check_branch
      %2067 = sbr.rel (0) target = $region37
    $region36: #{tpu_custom_call.1} parent=1 // pred_region
      %s2069 = ssub.s32 16384, 16384
      %2070 = vsyncadd [#allocation3], %s2069
      %s2071 = sshll.u32 [#allocation2], 4
      %s2072 = int_to_ptr.vmem [resolvable:$true] %s2071
      %2077 = dma.vmem_to_hbm [thread:$0]  %s2072, 16384, %s8, [#allocation3], 512, 512, 32
    $region37: #{tpu_custom_call.1} parent=1 // pred_fallthru
      _
    // Predicated region
    $region38: #{tpu_custom_call.1} parent=1 // pred_check
      _
    $region39: #{tpu_custom_call.1} parent=1 // pred_check_branch
      %2079 = sbr.rel (0) target = $region41
    $region40: #{tpu_custom_call.1} parent=1 // pred_region
      %2080 = dma.done [#allocation3], 16384
    $region41: #{tpu_custom_call.1} parent=1 // pred_fallthru
      _
    %2081 = vsyncpa [#allocation3], 1

</llo_original>
